<compile_context>
chip_gen: v6e
topology: v6e:2x2x1
jax: 0.10.0
libtpu: 0.0.40
codegen_flags: <defaults>
</compile_context>

<pallas_src>
import jax
import jax.numpy as jnp
from jax.experimental import pallas as pl
from jax.experimental.pallas import tpu as pltpu


# ----------------------------------------------------------------------------
# Pallas kernel: batched attention pooling + fused regressor
# ----------------------------------------------------------------------------
def _attn_pool_regress_kernel(hs_ref, w1_ref, b1_ref, w2_ref, wr_ref,
                              b2_ref, br_ref, out_ref):
    # hs_ref: (Bt, S, H) bf16 block for the current batch tile.
    Bt, S, H = hs_ref.shape
    M = w1_ref.shape[1]

    hs = hs_ref[...]                                      # (Bt, S, H) bf16
    hs2d = hs.reshape(Bt * S, H)                          # fill the MXU

    # attention[0] Linear(H->M): bf16 operands, f32 accumulation.
    # attention[1] Tanh (f32), then narrowed to bf16 (output bounded in [-1,1]).
    h = jnp.dot(hs2d, w1_ref[...], preferred_element_type=jnp.float32)
    h = jnp.tanh(h + b1_ref[...]).astype(jnp.bfloat16)    # (Bt*S, M) bf16
    h3 = h.reshape(Bt, S, M)

    # attention[2] Linear(M->1): bf16 broadcast-mul + f32-accumulated lane reduce.
    b2 = b2_ref[0, 0]
    scores = jnp.sum(h3 * w2_ref[...], axis=-1, dtype=jnp.float32) + b2   # (Bt, S)

    # Fused regressor reduce: r_s = hs_s . wr  (bf16 mul, f32 accumulation).
    r = jnp.sum(hs * wr_ref[...], axis=-1, dtype=jnp.float32)             # (Bt, S)

    # attention[3] Softmax(dim=1) folded into the weighted sum (lane-dense):
    #   out = (sum_s e_s * r_s) / (sum_s e_s) + br
    m = jnp.max(scores, axis=-1, keepdims=True)                           # (Bt, 1)
    e = jnp.exp(scores - m)                                               # (Bt, S)
    num = jnp.sum(e * r, axis=-1, keepdims=True)                          # (Bt, 1)
    den = jnp.sum(e, axis=-1, keepdims=True)                              # (Bt, 1)
    br = br_ref[0, 0]
    val = num * pl.reciprocal(den, approx=True) + br                      # (Bt, 1)

    # Lane-dense unmasked store; real values live in lane 0.
    out_ref[...] = jnp.broadcast_to(val, (Bt, 128))


# ----------------------------------------------------------------------------
# Tile / VMEM sizing helpers
# ----------------------------------------------------------------------------
def _tpu_vmem_capacity_bytes():
    try:
        info = pltpu.get_tpu_info()
        cap = getattr(info, "vmem_capacity_bytes", None)
        if cap:
            return int(cap)
    except Exception:
        pass
    return 128 << 20        # v5e / v6e default assumption


def _pick_batch_tile(B, S, H, *, max_block_bytes):
    """Choose Bt dividing B such that:
       * the bf16 hs block (Bt*S*H*2 bytes) stays under max_block_bytes,
       * Bt is sublane-aligned (multiple of 8) or Bt == B (unmasked (Bt,128) store),
       * nb = B/Bt >= 2 is preferred so the parallel grid axis can be split
         across v7x's two TensorCores."""
    bytes_per_b = S * H * 2
    valid = [bt for bt in range(1, B + 1)
             if B % bt == 0 and (bt % 8 == 0 or bt == B)]
    fitting = [bt for bt in valid if bt * bytes_per_b <= max_block_bytes]
    if not fitting:
        return min(valid)   # smallest legal tile; explicit vmem limit covers the rest
    best = max(fitting)
    split = [bt for bt in fitting if B // bt >= 2]
    if split:
        best_split = max(split)
        # Prefer the split unless it would shrink the block badly below ~1 MiB.
        if 2 * best_split >= best or best_split * bytes_per_b >= (1 << 20):
            return best_split
    return best


def _vmem_limit_bytes(Bt, S, H, M, vmem_cap):
    hs_block = Bt * S * H * 2                 # bf16 hs tile
    h_f32 = Bt * S * M * 4                    # MXU f32 accumulator before bf16 narrow
    h_bf16 = Bt * S * M * 2
    weights = 2 * (H * M * 2)                 # double-buffered bf16 W1 (small vecs ~0)
    need = 2 * hs_block + h_f32 + h_bf16 + weights + (4 << 20)   # + slack
    return int(min(max(need, 32 << 20), int(vmem_cap * 0.85)))


# ----------------------------------------------------------------------------
# Wrapper
# ----------------------------------------------------------------------------
def attn_pool_regress(hidden_states, w1, b1, w2, b2, wr, br, *, batch_tile=None):
    """hidden_states: (B, S, H) -> returns (B, 1) f32."""
    B, S, H = hidden_states.shape
    M = w1.shape[1]

    vmem_cap = _tpu_vmem_capacity_bytes()
    # Generation-aware hs-block target: ~3 MiB on 64 MiB-VMEM parts (v7x),
    # ~6 MiB on 128 MiB-VMEM parts (v5e / v6e).
    max_block = (3 << 20) if vmem_cap <= (64 << 20) else (6 << 20)

    Bt = batch_tile if batch_tile is not None else _pick_batch_tile(
        B, S, H, max_block_bytes=max_block)
    assert B % Bt == 0 and (Bt % 8 == 0 or Bt == B)
    nb = B // Bt

    # bf16 MXU / VPU operands; f32 accumulation happens inside the kernel.
    hs_bf16 = hidden_states.astype(jnp.bfloat16)   # no-op when backbone emits bf16
    w1_bf16 = w1.astype(jnp.bfloat16)
    w2_bf16 = w2.astype(jnp.bfloat16)
    wr_bf16 = wr.astype(jnp.bfloat16)

    out_padded = pl.pallas_call(
        _attn_pool_regress_kernel,
        out_shape=jax.ShapeDtypeStruct((B, 128), jnp.float32),
        grid_spec=pl.GridSpec(
            grid=(nb,),
            in_specs=[
                pl.BlockSpec((Bt, S, H), lambda b: (b, 0, 0)),      # hidden states (bf16)
                pl.BlockSpec((H, M), lambda b: (0, 0)),             # W1^T (bf16)
                pl.BlockSpec((1, M), lambda b: (0, 0)),             # b1 (f32)
                pl.BlockSpec((1, M), lambda b: (0, 0)),             # W2 row vec (bf16)
                pl.BlockSpec((1, H), lambda b: (0, 0)),             # Wr row vec (bf16)
                pl.BlockSpec(memory_space=pltpu.MemorySpace.SMEM),  # b2 scalar
                pl.BlockSpec(memory_space=pltpu.MemorySpace.SMEM),  # br scalar
            ],
            out_specs=pl.BlockSpec((Bt, 128), lambda b: (b, 0)),
        ),
        compiler_params=pltpu.CompilerParams(
            dimension_semantics=("parallel",),
            vmem_limit_bytes=_vmem_limit_bytes(Bt, S, H, M, vmem_cap),
        ),
    )(hs_bf16, w1_bf16, b1, w2_bf16, wr_bf16, b2, br)

    return out_padded[:, :1]                                        # (B, 1)


# ----------------------------------------------------------------------------
# Parameter construction (deterministic, PyTorch-Linear-style init)
# ----------------------------------------------------------------------------
def make_params(key, vocab=64, H=1024, M=512):
    def linear_init(k, fan_in, shape):
        bound = 1.0 / jnp.sqrt(fan_in)
        return jax.random.uniform(k, shape, jnp.float32, -bound, bound)

    ks = jax.random.split(key, 8)
    params = {
        "emb": 0.02 * jax.random.normal(ks[0], (vocab, H), jnp.float32),
        # attention.0: Linear(1024, 512) -> stored pre-transposed (H, M)
        "w1": linear_init(ks[1], H, (H, M)),
        "b1": linear_init(ks[2], H, (1, M)),
        # attention.2: Linear(512, 1) -> row vector (1, M), scalar bias
        "w2": linear_init(ks[3], M, (1, M)),
        "b2": linear_init(ks[4], M, (1, 1)),
        # regressor.0: Linear(1024, 1) -> row vector (1, H), scalar bias
        "wr": linear_init(ks[5], H, (1, H)),
        "br": linear_init(ks[6], H, (1, 1)),
    }
    return params


def forward(params, input_ids, attention_mask):
    # Backbone stand-in (glue): deterministic embedding gather emitting bf16
    # hidden states directly (no standalone f32->bf16 convert pass over (B,S,H)).
    # attention_mask is only consumed inside the (stand-in) backbone, matching
    # the original forward where the pooling head never sees the mask.
    del attention_mask
    hidden_states = params["emb"].astype(jnp.bfloat16)[input_ids]   # (B, S, H) bf16
    return attn_pool_regress(hidden_states, params["w1"], params["b1"],
                             params["w2"], params["b2"],
                             params["wr"], params["br"])


def forward_ref(params, input_ids, attention_mask):
    """Pure-JAX f32 reference for correctness checking."""
    del attention_mask
    hs = params["emb"][input_ids]                               # (B, S, H)
    h = jnp.tanh(hs @ params["w1"] + params["b1"])              # (B, S, M)
    scores = jnp.sum(h * params["w2"], axis=-1, keepdims=True) + params["b2"]
    w = jax.nn.softmax(scores, axis=1)                          # (B, S, 1)
    ctx = jnp.sum(w * hs, axis=1)                               # (B, H)
    return jnp.sum(ctx * params["wr"], axis=-1, keepdims=True) + params["br"]


# ----------------------------------------------------------------------------
if __name__ == "__main__":
    B, S, H, M, VOCAB = 2, 8, 1024, 512, 64

    key = jax.random.PRNGKey(0)
    k_param, k_ids = jax.random.split(key)

    params = make_params(k_param, vocab=VOCAB, H=H, M=M)
    input_ids = jax.random.randint(k_ids, (B, S), 0, VOCAB, dtype=jnp.int32)
    attention_mask = jnp.ones((B, S), dtype=jnp.int32)

    out = forward(params, input_ids, attention_mask)
    out = jax.block_until_ready(out)

    ref = forward_ref(params, input_ids, attention_mask)
    assert out.shape == (B, 1)
    # bf16 operands with f32 accumulation -> loosened tolerance vs f32 reference.
    assert jnp.allclose(out, ref, rtol=2e-2, atol=2e-2), (out, ref)

    print("KERNEL_OK")
</pallas_src>

<mosaic_0001>
module attributes {stable_mosaic.version = 11 : i64} {
  func.func @_attn_pool_regress_kernel(%arg0: i32, %arg1: memref<2x8x1024xbf16, #tpu.memory_space<vmem>>, %arg2: memref<1024x512xbf16, #tpu.memory_space<vmem>>, %arg3: memref<1x512xf32, #tpu.memory_space<vmem>>, %arg4: memref<1x512xbf16, #tpu.memory_space<vmem>>, %arg5: memref<1x1024xbf16, #tpu.memory_space<vmem>>, %arg6: memref<1x1xf32, #tpu.memory_space<smem>>, %arg7: memref<1x1xf32, #tpu.memory_space<smem>>, %arg8: memref<2x128xf32, #tpu.memory_space<vmem>>) attributes {dimension_semantics = [#tpu.dimension_semantics<parallel>], iteration_bounds = array<i64: 1>, scalar_prefetch = 0 : i64, scratch_operands = 0 : i64, tpu.core_type = #tpu.core_type<tc>, window_params = [{transform_indices = @transform_0, window_bounds = array<i64: 2, 8, 1024>}, {pipeline_mode = #tpu.pipeline_mode<synchronous>, transform_indices = @transform_1, window_bounds = array<i64: 1024, 512>}, {pipeline_mode = #tpu.pipeline_mode<synchronous>, transform_indices = @transform_2, window_bounds = array<i64: 1, 512>}, {pipeline_mode = #tpu.pipeline_mode<synchronous>, transform_indices = @transform_3, window_bounds = array<i64: 1, 512>}, {pipeline_mode = #tpu.pipeline_mode<synchronous>, transform_indices = @transform_4, window_bounds = array<i64: 1, 1024>}, {transform_indices = @transform_5, window_bounds = array<i64: 1, 1>}, {transform_indices = @transform_6, window_bounds = array<i64: 1, 1>}, {transform_indices = @transform_7, window_bounds = array<i64: 2, 128>}]} {
    %c0 = arith.constant 0 : index
    %c0_0 = arith.constant 0 : index
    %c0_1 = arith.constant 0 : index
    %0 = vector.load %arg1[%c0, %c0_0, %c0_1] : memref<2x8x1024xbf16, #tpu.memory_space<vmem>>, vector<2x8x1024xbf16>
    %1 = vector.shape_cast %0 : vector<2x8x1024xbf16> to vector<16x1024xbf16>
    %c0_2 = arith.constant 0 : index
    %c0_3 = arith.constant 0 : index
    %2 = vector.load %arg2[%c0_2, %c0_3] : memref<1024x512xbf16, #tpu.memory_space<vmem>>, vector<1024x512xbf16>
    %cst = arith.constant dense<0.000000e+00> : vector<16x512xf32>
    %3 = tpu.matmul %1, %2, %cst {dimension_numbers = #tpu.dot_dimension_numbers<[1], [0], [0], [1], [0, 0, 1, 1], [], []>} : vector<16x1024xbf16>, vector<1024x512xbf16>, vector<16x512xf32> -> vector<16x512xf32>
    %c0_4 = arith.constant 0 : index
    %c0_5 = arith.constant 0 : index
    %4 = vector.load %arg3[%c0_4, %c0_5] : memref<1x512xf32, #tpu.memory_space<vmem>>, vector<1x512xf32>
    %5 = vector.broadcast %4 : vector<1x512xf32> to vector<16x512xf32>
    %6 = arith.addf %3, %5 : vector<16x512xf32>
    %7 = math.tanh %6 : vector<16x512xf32>
    %8 = arith.truncf %7 : vector<16x512xf32> to vector<16x512xbf16>
    %9 = vector.shape_cast %8 : vector<16x512xbf16> to vector<2x8x512xbf16>
    %c0_6 = arith.constant 0 : index
    %c0_7 = arith.constant 0 : index
    %10 = memref.load %arg6[%c0_6, %c0_7] : memref<1x1xf32, #tpu.memory_space<smem>>
    %c0_8 = arith.constant 0 : index
    %c0_9 = arith.constant 0 : index
    %11 = vector.load %arg4[%c0_8, %c0_9] : memref<1x512xbf16, #tpu.memory_space<vmem>>, vector<1x512xbf16>
    %12 = vector.shape_cast %11 : vector<1x512xbf16> to vector<1x1x512xbf16>
    %13 = vector.broadcast %12 : vector<1x1x512xbf16> to vector<2x8x512xbf16>
    %14 = arith.mulf %9, %13 : vector<2x8x512xbf16>
    %15 = arith.extf %14 : vector<2x8x512xbf16> to vector<2x8x512xf32>
    %cst_10 = arith.constant dense<0.000000e+00> : vector<2x8xf32>
    %16 = vector.multi_reduction <add>, %15, %cst_10 [2] : vector<2x8x512xf32> to vector<2x8xf32>
    %17 = vector.broadcast %10 : f32 to vector<2x8xf32>
    %18 = arith.addf %16, %17 : vector<2x8xf32>
    %c0_11 = arith.constant 0 : index
    %c0_12 = arith.constant 0 : index
    %19 = vector.load %arg5[%c0_11, %c0_12] : memref<1x1024xbf16, #tpu.memory_space<vmem>>, vector<1x1024xbf16>
    %20 = vector.shape_cast %19 : vector<1x1024xbf16> to vector<1x1x1024xbf16>
    %21 = vector.broadcast %20 : vector<1x1x1024xbf16> to vector<2x8x1024xbf16>
    %22 = arith.mulf %0, %21 : vector<2x8x1024xbf16>
    %23 = arith.extf %22 : vector<2x8x1024xbf16> to vector<2x8x1024xf32>
    %cst_13 = arith.constant dense<0.000000e+00> : vector<2x8xf32>
    %24 = vector.multi_reduction <add>, %23, %cst_13 [2] : vector<2x8x1024xf32> to vector<2x8xf32>
    %cst_14 = arith.constant dense<0xFF800000> : vector<2xf32>
    %25 = vector.multi_reduction <maximumf>, %18, %cst_14 [1] : vector<2x8xf32> to vector<2xf32>
    %26 = vector.shape_cast %25 : vector<2xf32> to vector<2x1xf32>
    %27 = vector.broadcast %26 : vector<2x1xf32> to vector<2x8xf32>
    %28 = arith.subf %18, %27 : vector<2x8xf32>
    %29 = math.exp %28 : vector<2x8xf32>
    %30 = arith.mulf %29, %24 : vector<2x8xf32>
    %cst_15 = arith.constant dense<0.000000e+00> : vector<2xf32>
    %31 = vector.multi_reduction <add>, %30, %cst_15 [1] : vector<2x8xf32> to vector<2xf32>
    %32 = vector.shape_cast %31 : vector<2xf32> to vector<2x1xf32>
    %cst_16 = arith.constant dense<0.000000e+00> : vector<2xf32>
    %33 = vector.multi_reduction <add>, %29, %cst_16 [1] : vector<2x8xf32> to vector<2xf32>
    %34 = vector.shape_cast %33 : vector<2xf32> to vector<2x1xf32>
    %c0_17 = arith.constant 0 : index
    %c0_18 = arith.constant 0 : index
    %35 = memref.load %arg7[%c0_17, %c0_18] : memref<1x1xf32, #tpu.memory_space<smem>>
    %36 = tpu.reciprocal %34 {approx = true} : vector<2x1xf32> -> vector<2x1xf32>
    %37 = arith.mulf %32, %36 : vector<2x1xf32>
    %38 = vector.broadcast %35 : f32 to vector<2x1xf32>
    %39 = arith.addf %37, %38 : vector<2x1xf32>
    %40 = vector.shape_cast %39 : vector<2x1xf32> to vector<2x1xf32>
    %41 = vector.broadcast %40 : vector<2x1xf32> to vector<2x128xf32>
    %c0_19 = arith.constant 0 : index
    %c0_20 = arith.constant 0 : index
    %42 = vector.load %arg8[%c0_19, %c0_20] : memref<2x128xf32, #tpu.memory_space<vmem>>, vector<2x128xf32>
    tpu.vector_store %arg8[%c0_19, %c0_20], %41 {strides = array<i32>} : memref<2x128xf32, #tpu.memory_space<vmem>>, vector<2x128xf32>,
    return
  }
  func.func @transform_0(%arg0: i32) -> (i32, i32, i32) {
    %c0_i32 = arith.constant 0 : i32
    %c0_i32_0 = arith.constant 0 : i32
    %c0_i32_1 = arith.constant 0 : i32
    return %arg0, %c0_i32, %c0_i32_0 : i32, i32, i32
  }
  func.func @transform_1(%arg0: i32) -> (i32, i32) {
    %c0_i32 = arith.constant 0 : i32
    %c0_i32_0 = arith.constant 0 : i32
    %c0_i32_1 = arith.constant 0 : i32
    return %c0_i32, %c0_i32_0 : i32, i32
  }
  func.func @transform_2(%arg0: i32) -> (i32, i32) {
    %c0_i32 = arith.constant 0 : i32
    %c0_i32_0 = arith.constant 0 : i32
    %c0_i32_1 = arith.constant 0 : i32
    return %c0_i32, %c0_i32_0 : i32, i32
  }
  func.func @transform_3(%arg0: i32) -> (i32, i32) {
    %c0_i32 = arith.constant 0 : i32
    %c0_i32_0 = arith.constant 0 : i32
    %c0_i32_1 = arith.constant 0 : i32
    return %c0_i32, %c0_i32_0 : i32, i32
  }
  func.func @transform_4(%arg0: i32) -> (i32, i32) {
    %c0_i32 = arith.constant 0 : i32
    %c0_i32_0 = arith.constant 0 : i32
    %c0_i32_1 = arith.constant 0 : i32
    return %c0_i32, %c0_i32_0 : i32, i32
  }
  func.func @transform_5(%arg0: i32) -> (i32, i32) {
    %c0_i32 = arith.constant 0 : i32
    %c0_i32_0 = arith.constant 0 : i32
    %c0_i32_1 = arith.constant 0 : i32
    return %c0_i32, %c0_i32_0 : i32, i32
  }
  func.func @transform_6(%arg0: i32) -> (i32, i32) {
    %c0_i32 = arith.constant 0 : i32
    %c0_i32_0 = arith.constant 0 : i32
    %c0_i32_1 = arith.constant 0 : i32
    return %c0_i32, %c0_i32_0 : i32, i32
  }
  func.func @transform_7(%arg0: i32) -> (i32, i32) {
    %c0_i32 = arith.constant 0 : i32
    %c0_i32_0 = arith.constant 0 : i32
    return %arg0, %c0_i32 : i32, i32
  }
}

</mosaic_0001>

<llo_original>
// kernel: tpu_custom_call.1
$region0: #{tpu_custom_call.1}
  #allocation0 [shape = 'u32[]', space=smem, size = 0x4, offset = 0x4, fixed_abs, tag = 'smem constant byte address 0x4 - core index']
  #allocation1 [shape = 'u32[144,128]{1,0:T(1,128)}', space=vmem, size = 0x12000, scoped, tag = 'internal scratch']
  #allocation2 [shape = 'f32[1,1]{1,0:T(1,128)S(6)}', space=smem, size = 0x200, scoped, tag = 'scoped memory for tpu_custom_call.1']
  #allocation3 [shape = 'f32[1,1]{1,0:T(1,128)S(6)}', space=smem, size = 0x200, scoped, tag = 'scoped memory for tpu_custom_call.1']
  %s0 = inlined_call_operand.hbm [shape: bf16[2,8,1024], index: 0, kind: input, shape index: {}]
  %s1 = inlined_call_operand.hbm [shape: bf16[1024,512], index: 1, kind: input, shape index: {}]
  %s2 = inlined_call_operand.hbm [shape: f32[1,512], index: 2, kind: input, shape index: {}]
  %s3 = inlined_call_operand.hbm [shape: bf16[1,512], index: 3, kind: input, shape index: {}]
  %s4 = inlined_call_operand.vmem [shape: bf16[1,1024], index: 4, kind: input, shape index: {}]
  %s5 = inlined_call_operand.<no memory space> [shape: f32[1,1], index: 5, kind: input, shape index: {}]
  %s6 = inlined_call_operand.<no memory space> [shape: f32[1,1], index: 6, kind: input, shape index: {}]
  %s7 = inlined_call_operand.hbm [shape: f32[2,128], index: 7, kind: output, shape index: {}]
  %s8 = sld [smem:[#allocation0]]
  $region54: #{tpu_custom_call.1} parent=0
    _
  %s10 = ssub.s32 1, %s8
  %s11 = scalar_select 0, %s10, %s8
  %12 = sst [smem:[#allocation2]] %s5
  %13 = sst [smem:[#allocation3]] %s6
  $region1: #{tpu_custom_call.1} parent=0
    #allocation4 [shape = 'u8[32768]{0}', space=vmem, size = 0x8000, scoped, tag = 'input window, operand 0, single buffered']
    #allocation5 [shape = 's32[1]{0}', space=sflag, size = 0x4, scoped, tag = 'scoped memory for tpu_custom_call.1']
    #allocation6 [shape = 's32[1]{0}', space=sflag, size = 0x4, scoped, tag = 'scoped memory for tpu_custom_call.1']
    #allocation7 [shape = 'u8[1048576]{0}', space=vmem, size = 0x100000, scoped, tag = 'input window, operand 1, single buffered']
    #allocation8 [shape = 's32[1]{0}', space=sflag, size = 0x4, scoped, tag = 'scoped memory for tpu_custom_call.1']
    #allocation9 [shape = 'u8[2048]{0}', space=vmem, size = 0x800, scoped, tag = 'input window, operand 2, single buffered']
    #allocation10 [shape = 'u8[2048]{0}', space=vmem, size = 0x800, scoped, tag = 'input window, operand 3, single buffered']
    #allocation11 [shape = 's32[1]{0}', space=sflag, size = 0x4, scoped, tag = 'scoped memory for tpu_custom_call.1']
    #allocation12 [shape = 'u8[1024]{0}', space=vmem, size = 0x400, scoped, tag = 'output window, operand 0, single buffered']
    %14 = vsyncpa [#allocation5], 0
    %15 = vsyncpa [#allocation8], 0
    %16 = vsyncpa [#allocation11], 0
    %17 = vsyncpa [#allocation6], 0
    // Predicated region
    $region2: #{tpu_custom_call.1} parent=1 // pred_check
      _
    $region3: #{tpu_custom_call.1} parent=1 // pred_check_branch
      %19 = sbr.rel (0) target = $region5
    $region4: #{tpu_custom_call.1} parent=1 // pred_region
      %s21 = ssub.s32 1024, 1024
      %22 = vsyncadd [#allocation5], %s21
      %s23 = sshll.u32 [#allocation4], 4
      %s24 = int_to_ptr.vmem [resolvable:$true] %s23
      %29 = dma.hbm_to_vmem [thread:$0]  %s0, 1024, %s24, [#allocation5], 512, 512, 32
    $region5: #{tpu_custom_call.1} parent=1 // pred_fallthru
      _
    // Predicated region
    $region6: #{tpu_custom_call.1} parent=1 // pred_check
      _
    $region7: #{tpu_custom_call.1} parent=1 // pred_check_branch
      %31 = sbr.rel (0) target = $region9
    $region8: #{tpu_custom_call.1} parent=1 // pred_region
      %s33 = ssub.s32 32768, 32768
      %34 = vsyncadd [#allocation8], %s33
      %s35 = sshll.u32 [#allocation7], 4
      %s36 = int_to_ptr.vmem [resolvable:$true] %s35
      %41 = dma.hbm_to_vmem [thread:$0]  %s1, 32768, %s36, [#allocation8], 256, 256, 16
    $region9: #{tpu_custom_call.1} parent=1 // pred_fallthru
      _
    // Predicated region
    $region10: #{tpu_custom_call.1} parent=1 // pred_check
      _
    $region11: #{tpu_custom_call.1} parent=1 // pred_check_branch
      %43 = sbr.rel (0) target = $region13
    $region12: #{tpu_custom_call.1} parent=1 // pred_region
      %s45 = ssub.s32 64, 64
      %46 = vsyncadd [#allocation8], %s45
      %s48 = sshll.u32 [#allocation9], 4
      %s49 = int_to_ptr.vmem [resolvable:$true] %s48
      %51 = dma.hbm_to_vmem [thread:$0]  %s2, 64, %s49, [#allocation8]
    $region13: #{tpu_custom_call.1} parent=1 // pred_fallthru
      _
    // Predicated region
    $region14: #{tpu_custom_call.1} parent=1 // pred_check
      _
    $region15: #{tpu_custom_call.1} parent=1 // pred_check_branch
      %53 = sbr.rel (0) target = $region17
    $region16: #{tpu_custom_call.1} parent=1 // pred_region
      %s55 = ssub.s32 64, 64
      %56 = vsyncadd [#allocation11], %s55
      %s58 = sshll.u32 [#allocation10], 4
      %s59 = int_to_ptr.vmem [resolvable:$true] %s58
      %61 = dma.hbm_to_vmem [thread:$0]  %s3, 64, %s59, [#allocation11]
    $region17: #{tpu_custom_call.1} parent=1 // pred_fallthru
      _
    // Predicated region
    $region18: #{tpu_custom_call.1} parent=1 // pred_check
      _
    $region19: #{tpu_custom_call.1} parent=1 // pred_check_branch
      %63 = sbr.rel (0) target = $region21
    $region20: #{tpu_custom_call.1} parent=1 // pred_region
      _
    $region21: #{tpu_custom_call.1} parent=1 // pred_fallthru
      _
    // Predicated region
    $region22: #{tpu_custom_call.1} parent=1 // pred_check
      _
    $region23: #{tpu_custom_call.1} parent=1 // pred_check_branch
      %65 = sbr.rel (0) target = $region25
    $region24: #{tpu_custom_call.1} parent=1 // pred_region
      _
    $region25: #{tpu_custom_call.1} parent=1 // pred_fallthru
      _
    // Predicated region
    $region26: #{tpu_custom_call.1} parent=1 // pred_check
      _
    $region27: #{tpu_custom_call.1} parent=1 // pred_check_branch
      %67 = sbr.rel (0) target = $region29
    $region28: #{tpu_custom_call.1} parent=1 // pred_region
      _
    $region29: #{tpu_custom_call.1} parent=1 // pred_fallthru
      _
    // Predicated region
    $region30: #{tpu_custom_call.1} parent=1 // pred_check
      _
    $region31: #{tpu_custom_call.1} parent=1 // pred_check_branch
      %69 = sbr.rel (0) target = $region33
    $region32: #{tpu_custom_call.1} parent=1 // pred_region
      %70 = dma.done [#allocation5], 1024
    $region33: #{tpu_custom_call.1} parent=1 // pred_fallthru
      _
    // Predicated region
    $region34: #{tpu_custom_call.1} parent=1 // pred_check
      _
    $region35: #{tpu_custom_call.1} parent=1 // pred_check_branch
      %72 = sbr.rel (0) target = $region37
    $region36: #{tpu_custom_call.1} parent=1 // pred_region
      %73 = dma.done [#allocation8], 32768
    $region37: #{tpu_custom_call.1} parent=1 // pred_fallthru
      _
    // Predicated region
    $region38: #{tpu_custom_call.1} parent=1 // pred_check
      _
    $region39: #{tpu_custom_call.1} parent=1 // pred_check_branch
      %75 = sbr.rel (0) target = $region41
    $region40: #{tpu_custom_call.1} parent=1 // pred_region
      %76 = dma.done [#allocation8], 64
    $region41: #{tpu_custom_call.1} parent=1 // pred_fallthru
      _
    // Predicated region
    $region42: #{tpu_custom_call.1} parent=1 // pred_check
      _
    $region43: #{tpu_custom_call.1} parent=1 // pred_check_branch
      %78 = sbr.rel (0) target = $region45
    $region44: #{tpu_custom_call.1} parent=1 // pred_region
      %79 = dma.done [#allocation11], 64
    $region45: #{tpu_custom_call.1} parent=1 // pred_fallthru
      _
    %v80 = vld [vmem:[#allocation4] sm:$0xff]
    %v81 = vld [vmem:[#allocation4 + $0x8] sm:$0xff]
    %v82 = vld [vmem:[#allocation4 + $0x10] sm:$0xff]
    %v83 = vld [vmem:[#allocation4 + $0x18] sm:$0xff]
    %v84 = vld [vmem:[#allocation4 + $0x20] sm:$0xff]
    %v85 = vld [vmem:[#allocation4 + $0x28] sm:$0xff]
    %v86 = vld [vmem:[#allocation4 + $0x30] sm:$0xff]
    %v87 = vld [vmem:[#allocation4 + $0x38] sm:$0xff]
    %v88 = vld [vmem:[#allocation7] sm:$0xff]
    %v89 = vld [vmem:[#allocation7 + $0x8] sm:$0xff]
    %v90 = vld [vmem:[#allocation7 + $0x10] sm:$0xff]
    %v91 = vld [vmem:[#allocation7 + $0x18] sm:$0xff]
    %v92 = vld [vmem:[#allocation7 + $0x20] sm:$0xff]
    %v93 = vld [vmem:[#allocation7 + $0x28] sm:$0xff]
    %v94 = vld [vmem:[#allocation7 + $0x30] sm:$0xff]
    %v95 = vld [vmem:[#allocation7 + $0x38] sm:$0xff]
    %v96 = vld [vmem:[#allocation7 + $0x40] sm:$0xff]
    %v97 = vld [vmem:[#allocation7 + $0x48] sm:$0xff]
    %v98 = vld [vmem:[#allocation7 + $0x50] sm:$0xff]
    %v99 = vld [vmem:[#allocation7 + $0x58] sm:$0xff]
    %v100 = vld [vmem:[#allocation7 + $0x60] sm:$0xff]
    %v101 = vld [vmem:[#allocation7 + $0x68] sm:$0xff]
    %v102 = vld [vmem:[#allocation7 + $0x70] sm:$0xff]
    %v103 = vld [vmem:[#allocation7 + $0x78] sm:$0xff]
    %v104 = vld [vmem:[#allocation7 + $0x80] sm:$0xff]
    %v105 = vld [vmem:[#allocation7 + $0x88] sm:$0xff]
    %v106 = vld [vmem:[#allocation7 + $0x90] sm:$0xff]
    %v107 = vld [vmem:[#allocation7 + $0x98] sm:$0xff]
    %v108 = vld [vmem:[#allocation7 + $0xa0] sm:$0xff]
    %v109 = vld [vmem:[#allocation7 + $0xa8] sm:$0xff]
    %v110 = vld [vmem:[#allocation7 + $0xb0] sm:$0xff]
    %v111 = vld [vmem:[#allocation7 + $0xb8] sm:$0xff]
    %v112 = vld [vmem:[#allocation7 + $0xc0] sm:$0xff]
    %v113 = vld [vmem:[#allocation7 + $0xc8] sm:$0xff]
    %v114 = vld [vmem:[#allocation7 + $0xd0] sm:$0xff]
    %v115 = vld [vmem:[#allocation7 + $0xd8] sm:$0xff]
    %v116 = vld [vmem:[#allocation7 + $0xe0] sm:$0xff]
    %v117 = vld [vmem:[#allocation7 + $0xe8] sm:$0xff]
    %v118 = vld [vmem:[#allocation7 + $0xf0] sm:$0xff]
    %v119 = vld [vmem:[#allocation7 + $0xf8] sm:$0xff]
    %v120 = vld [vmem:[#allocation7 + $0x100] sm:$0xff]
    %v121 = vld [vmem:[#allocation7 + $0x108] sm:$0xff]
    %v122 = vld [vmem:[#allocation7 + $0x110] sm:$0xff]
    %v123 = vld [vmem:[#allocation7 + $0x118] sm:$0xff]
    %v124 = vld [vmem:[#allocation7 + $0x120] sm:$0xff]
    %v125 = vld [vmem:[#allocation7 + $0x128] sm:$0xff]
    %v126 = vld [vmem:[#allocation7 + $0x130] sm:$0xff]
    %v127 = vld [vmem:[#allocation7 + $0x138] sm:$0xff]
    %v128 = vld [vmem:[#allocation7 + $0x140] sm:$0xff]
    %v129 = vld [vmem:[#allocation7 + $0x148] sm:$0xff]
    %v130 = vld [vmem:[#allocation7 + $0x150] sm:$0xff]
    %v131 = vld [vmem:[#allocation7 + $0x158] sm:$0xff]
    %v132 = vld [vmem:[#allocation7 + $0x160] sm:$0xff]
    %v133 = vld [vmem:[#allocation7 + $0x168] sm:$0xff]
    %v134 = vld [vmem:[#allocation7 + $0x170] sm:$0xff]
    %v135 = vld [vmem:[#allocation7 + $0x178] sm:$0xff]
    %v136 = vld [vmem:[#allocation7 + $0x180] sm:$0xff]
    %v137 = vld [vmem:[#allocation7 + $0x188] sm:$0xff]
    %v138 = vld [vmem:[#allocation7 + $0x190] sm:$0xff]
    %v139 = vld [vmem:[#allocation7 + $0x198] sm:$0xff]
    %v140 = vld [vmem:[#allocation7 + $0x1a0] sm:$0xff]
    %v141 = vld [vmem:[#allocation7 + $0x1a8] sm:$0xff]
    %v142 = vld [vmem:[#allocation7 + $0x1b0] sm:$0xff]
    %v143 = vld [vmem:[#allocation7 + $0x1b8] sm:$0xff]
    %v144 = vld [vmem:[#allocation7 + $0x1c0] sm:$0xff]
    %v145 = vld [vmem:[#allocation7 + $0x1c8] sm:$0xff]
    %v146 = vld [vmem:[#allocation7 + $0x1d0] sm:$0xff]
    %v147 = vld [vmem:[#allocation7 + $0x1d8] sm:$0xff]
    %v148 = vld [vmem:[#allocation7 + $0x1e0] sm:$0xff]
    %v149 = vld [vmem:[#allocation7 + $0x1e8] sm:$0xff]
    %v150 = vld [vmem:[#allocation7 + $0x1f0] sm:$0xff]
    %v151 = vld [vmem:[#allocation7 + $0x1f8] sm:$0xff]
    %v152 = vld [vmem:[#allocation7 + $0x200] sm:$0xff]
    %v153 = vld [vmem:[#allocation7 + $0x208] sm:$0xff]
    %v154 = vld [vmem:[#allocation7 + $0x210] sm:$0xff]
    %v155 = vld [vmem:[#allocation7 + $0x218] sm:$0xff]
    %v156 = vld [vmem:[#allocation7 + $0x220] sm:$0xff]
    %v157 = vld [vmem:[#allocation7 + $0x228] sm:$0xff]
    %v158 = vld [vmem:[#allocation7 + $0x230] sm:$0xff]
    %v159 = vld [vmem:[#allocation7 + $0x238] sm:$0xff]
    %v160 = vld [vmem:[#allocation7 + $0x240] sm:$0xff]
    %v161 = vld [vmem:[#allocation7 + $0x248] sm:$0xff]
    %v162 = vld [vmem:[#allocation7 + $0x250] sm:$0xff]
    %v163 = vld [vmem:[#allocation7 + $0x258] sm:$0xff]
    %v164 = vld [vmem:[#allocation7 + $0x260] sm:$0xff]
    %v165 = vld [vmem:[#allocation7 + $0x268] sm:$0xff]
    %v166 = vld [vmem:[#allocation7 + $0x270] sm:$0xff]
    %v167 = vld [vmem:[#allocation7 + $0x278] sm:$0xff]
    %v168 = vld [vmem:[#allocation7 + $0x280] sm:$0xff]
    %v169 = vld [vmem:[#allocation7 + $0x288] sm:$0xff]
    %v170 = vld [vmem:[#allocation7 + $0x290] sm:$0xff]
    %v171 = vld [vmem:[#allocation7 + $0x298] sm:$0xff]
    %v172 = vld [vmem:[#allocation7 + $0x2a0] sm:$0xff]
    %v173 = vld [vmem:[#allocation7 + $0x2a8] sm:$0xff]
    %v174 = vld [vmem:[#allocation7 + $0x2b0] sm:$0xff]
    %v175 = vld [vmem:[#allocation7 + $0x2b8] sm:$0xff]
    %v176 = vld [vmem:[#allocation7 + $0x2c0] sm:$0xff]
    %v177 = vld [vmem:[#allocation7 + $0x2c8] sm:$0xff]
    %v178 = vld [vmem:[#allocation7 + $0x2d0] sm:$0xff]
    %v179 = vld [vmem:[#allocation7 + $0x2d8] sm:$0xff]
    %v180 = vld [vmem:[#allocation7 + $0x2e0] sm:$0xff]
    %v181 = vld [vmem:[#allocation7 + $0x2e8] sm:$0xff]
    %v182 = vld [vmem:[#allocation7 + $0x2f0] sm:$0xff]
    %v183 = vld [vmem:[#allocation7 + $0x2f8] sm:$0xff]
    %v184 = vld [vmem:[#allocation7 + $0x300] sm:$0xff]
    %v185 = vld [vmem:[#allocation7 + $0x308] sm:$0xff]
    %v186 = vld [vmem:[#allocation7 + $0x310] sm:$0xff]
    %v187 = vld [vmem:[#allocation7 + $0x318] sm:$0xff]
    %v188 = vld [vmem:[#allocation7 + $0x320] sm:$0xff]
    %v189 = vld [vmem:[#allocation7 + $0x328] sm:$0xff]
    %v190 = vld [vmem:[#allocation7 + $0x330] sm:$0xff]
    %v191 = vld [vmem:[#allocation7 + $0x338] sm:$0xff]
    %v192 = vld [vmem:[#allocation7 + $0x340] sm:$0xff]
    %v193 = vld [vmem:[#allocation7 + $0x348] sm:$0xff]
    %v194 = vld [vmem:[#allocation7 + $0x350] sm:$0xff]
    %v195 = vld [vmem:[#allocation7 + $0x358] sm:$0xff]
    %v196 = vld [vmem:[#allocation7 + $0x360] sm:$0xff]
    %v197 = vld [vmem:[#allocation7 + $0x368] sm:$0xff]
    %v198 = vld [vmem:[#allocation7 + $0x370] sm:$0xff]
    %v199 = vld [vmem:[#allocation7 + $0x378] sm:$0xff]
    %v200 = vld [vmem:[#allocation7 + $0x380] sm:$0xff]
    %v201 = vld [vmem:[#allocation7 + $0x388] sm:$0xff]
    %v202 = vld [vmem:[#allocation7 + $0x390] sm:$0xff]
    %v203 = vld [vmem:[#allocation7 + $0x398] sm:$0xff]
    %v204 = vld [vmem:[#allocation7 + $0x3a0] sm:$0xff]
    %v205 = vld [vmem:[#allocation7 + $0x3a8] sm:$0xff]
    %v206 = vld [vmem:[#allocation7 + $0x3b0] sm:$0xff]
    %v207 = vld [vmem:[#allocation7 + $0x3b8] sm:$0xff]
    %v208 = vld [vmem:[#allocation7 + $0x3c0] sm:$0xff]
    %v209 = vld [vmem:[#allocation7 + $0x3c8] sm:$0xff]
    %v210 = vld [vmem:[#allocation7 + $0x3d0] sm:$0xff]
    %v211 = vld [vmem:[#allocation7 + $0x3d8] sm:$0xff]
    %v212 = vld [vmem:[#allocation7 + $0x3e0] sm:$0xff]
    %v213 = vld [vmem:[#allocation7 + $0x3e8] sm:$0xff]
    %v214 = vld [vmem:[#allocation7 + $0x3f0] sm:$0xff]
    %v215 = vld [vmem:[#allocation7 + $0x3f8] sm:$0xff]
    %v216 = vld [vmem:[#allocation7 + $0x400] sm:$0xff]
    %v217 = vld [vmem:[#allocation7 + $0x408] sm:$0xff]
    %v218 = vld [vmem:[#allocation7 + $0x410] sm:$0xff]
    %v219 = vld [vmem:[#allocation7 + $0x418] sm:$0xff]
    %v220 = vld [vmem:[#allocation7 + $0x420] sm:$0xff]
    %v221 = vld [vmem:[#allocation7 + $0x428] sm:$0xff]
    %v222 = vld [vmem:[#allocation7 + $0x430] sm:$0xff]
    %v223 = vld [vmem:[#allocation7 + $0x438] sm:$0xff]
    %v224 = vld [vmem:[#allocation7 + $0x440] sm:$0xff]
    %v225 = vld [vmem:[#allocation7 + $0x448] sm:$0xff]
    %v226 = vld [vmem:[#allocation7 + $0x450] sm:$0xff]
    %v227 = vld [vmem:[#allocation7 + $0x458] sm:$0xff]
    %v228 = vld [vmem:[#allocation7 + $0x460] sm:$0xff]
    %v229 = vld [vmem:[#allocation7 + $0x468] sm:$0xff]
    %v230 = vld [vmem:[#allocation7 + $0x470] sm:$0xff]
    %v231 = vld [vmem:[#allocation7 + $0x478] sm:$0xff]
    %v232 = vld [vmem:[#allocation7 + $0x480] sm:$0xff]
    %v233 = vld [vmem:[#allocation7 + $0x488] sm:$0xff]
    %v234 = vld [vmem:[#allocation7 + $0x490] sm:$0xff]
    %v235 = vld [vmem:[#allocation7 + $0x498] sm:$0xff]
    %v236 = vld [vmem:[#allocation7 + $0x4a0] sm:$0xff]
    %v237 = vld [vmem:[#allocation7 + $0x4a8] sm:$0xff]
    %v238 = vld [vmem:[#allocation7 + $0x4b0] sm:$0xff]
    %v239 = vld [vmem:[#allocation7 + $0x4b8] sm:$0xff]
    %v240 = vld [vmem:[#allocation7 + $0x4c0] sm:$0xff]
    %v241 = vld [vmem:[#allocation7 + $0x4c8] sm:$0xff]
    %v242 = vld [vmem:[#allocation7 + $0x4d0] sm:$0xff]
    %v243 = vld [vmem:[#allocation7 + $0x4d8] sm:$0xff]
    %v244 = vld [vmem:[#allocation7 + $0x4e0] sm:$0xff]
    %v245 = vld [vmem:[#allocation7 + $0x4e8] sm:$0xff]
    %v246 = vld [vmem:[#allocation7 + $0x4f0] sm:$0xff]
    %v247 = vld [vmem:[#allocation7 + $0x4f8] sm:$0xff]
    %v248 = vld [vmem:[#allocation7 + $0x500] sm:$0xff]
    %v249 = vld [vmem:[#allocation7 + $0x508] sm:$0xff]
    %v250 = vld [vmem:[#allocation7 + $0x510] sm:$0xff]
    %v251 = vld [vmem:[#allocation7 + $0x518] sm:$0xff]
    %v252 = vld [vmem:[#allocation7 + $0x520] sm:$0xff]
    %v253 = vld [vmem:[#allocation7 + $0x528] sm:$0xff]
    %v254 = vld [vmem:[#allocation7 + $0x530] sm:$0xff]
    %v255 = vld [vmem:[#allocation7 + $0x538] sm:$0xff]
    %v256 = vld [vmem:[#allocation7 + $0x540] sm:$0xff]
    %v257 = vld [vmem:[#allocation7 + $0x548] sm:$0xff]
    %v258 = vld [vmem:[#allocation7 + $0x550] sm:$0xff]
    %v259 = vld [vmem:[#allocation7 + $0x558] sm:$0xff]
    %v260 = vld [vmem:[#allocation7 + $0x560] sm:$0xff]
    %v261 = vld [vmem:[#allocation7 + $0x568] sm:$0xff]
    %v262 = vld [vmem:[#allocation7 + $0x570] sm:$0xff]
    %v263 = vld [vmem:[#allocation7 + $0x578] sm:$0xff]
    %v264 = vld [vmem:[#allocation7 + $0x580] sm:$0xff]
    %v265 = vld [vmem:[#allocation7 + $0x588] sm:$0xff]
    %v266 = vld [vmem:[#allocation7 + $0x590] sm:$0xff]
    %v267 = vld [vmem:[#allocation7 + $0x598] sm:$0xff]
    %v268 = vld [vmem:[#allocation7 + $0x5a0] sm:$0xff]
    %v269 = vld [vmem:[#allocation7 + $0x5a8] sm:$0xff]
    %v270 = vld [vmem:[#allocation7 + $0x5b0] sm:$0xff]
    %v271 = vld [vmem:[#allocation7 + $0x5b8] sm:$0xff]
    %v272 = vld [vmem:[#allocation7 + $0x5c0] sm:$0xff]
    %v273 = vld [vmem:[#allocation7 + $0x5c8] sm:$0xff]
    %v274 = vld [vmem:[#allocation7 + $0x5d0] sm:$0xff]
    %v275 = vld [vmem:[#allocation7 + $0x5d8] sm:$0xff]
    %v276 = vld [vmem:[#allocation7 + $0x5e0] sm:$0xff]
    %v277 = vld [vmem:[#allocation7 + $0x5e8] sm:$0xff]
    %v278 = vld [vmem:[#allocation7 + $0x5f0] sm:$0xff]
    %v279 = vld [vmem:[#allocation7 + $0x5f8] sm:$0xff]
    %v280 = vld [vmem:[#allocation7 + $0x600] sm:$0xff]
    %v281 = vld [vmem:[#allocation7 + $0x608] sm:$0xff]
    %v282 = vld [vmem:[#allocation7 + $0x610] sm:$0xff]
    %v283 = vld [vmem:[#allocation7 + $0x618] sm:$0xff]
    %v284 = vld [vmem:[#allocation7 + $0x620] sm:$0xff]
    %v285 = vld [vmem:[#allocation7 + $0x628] sm:$0xff]
    %v286 = vld [vmem:[#allocation7 + $0x630] sm:$0xff]
    %v287 = vld [vmem:[#allocation7 + $0x638] sm:$0xff]
    %v288 = vld [vmem:[#allocation7 + $0x640] sm:$0xff]
    %v289 = vld [vmem:[#allocation7 + $0x648] sm:$0xff]
    %v290 = vld [vmem:[#allocation7 + $0x650] sm:$0xff]
    %v291 = vld [vmem:[#allocation7 + $0x658] sm:$0xff]
    %v292 = vld [vmem:[#allocation7 + $0x660] sm:$0xff]
    %v293 = vld [vmem:[#allocation7 + $0x668] sm:$0xff]
    %v294 = vld [vmem:[#allocation7 + $0x670] sm:$0xff]
    %v295 = vld [vmem:[#allocation7 + $0x678] sm:$0xff]
    %v296 = vld [vmem:[#allocation7 + $0x680] sm:$0xff]
    %v297 = vld [vmem:[#allocation7 + $0x688] sm:$0xff]
    %v298 = vld [vmem:[#allocation7 + $0x690] sm:$0xff]
    %v299 = vld [vmem:[#allocation7 + $0x698] sm:$0xff]
    %v300 = vld [vmem:[#allocation7 + $0x6a0] sm:$0xff]
    %v301 = vld [vmem:[#allocation7 + $0x6a8] sm:$0xff]
    %v302 = vld [vmem:[#allocation7 + $0x6b0] sm:$0xff]
    %v303 = vld [vmem:[#allocation7 + $0x6b8] sm:$0xff]
    %v304 = vld [vmem:[#allocation7 + $0x6c0] sm:$0xff]
    %v305 = vld [vmem:[#allocation7 + $0x6c8] sm:$0xff]
    %v306 = vld [vmem:[#allocation7 + $0x6d0] sm:$0xff]
    %v307 = vld [vmem:[#allocation7 + $0x6d8] sm:$0xff]
    %v308 = vld [vmem:[#allocation7 + $0x6e0] sm:$0xff]
    %v309 = vld [vmem:[#allocation7 + $0x6e8] sm:$0xff]
    %v310 = vld [vmem:[#allocation7 + $0x6f0] sm:$0xff]
    %v311 = vld [vmem:[#allocation7 + $0x6f8] sm:$0xff]
    %v312 = vld [vmem:[#allocation7 + $0x700] sm:$0xff]
    %v313 = vld [vmem:[#allocation7 + $0x708] sm:$0xff]
    %v314 = vld [vmem:[#allocation7 + $0x710] sm:$0xff]
    %v315 = vld [vmem:[#allocation7 + $0x718] sm:$0xff]
    %v316 = vld [vmem:[#allocation7 + $0x720] sm:$0xff]
    %v317 = vld [vmem:[#allocation7 + $0x728] sm:$0xff]
    %v318 = vld [vmem:[#allocation7 + $0x730] sm:$0xff]
    %v319 = vld [vmem:[#allocation7 + $0x738] sm:$0xff]
    %v320 = vld [vmem:[#allocation7 + $0x740] sm:$0xff]
    %v321 = vld [vmem:[#allocation7 + $0x748] sm:$0xff]
    %v322 = vld [vmem:[#allocation7 + $0x750] sm:$0xff]
    %v323 = vld [vmem:[#allocation7 + $0x758] sm:$0xff]
    %v324 = vld [vmem:[#allocation7 + $0x760] sm:$0xff]
    %v325 = vld [vmem:[#allocation7 + $0x768] sm:$0xff]
    %v326 = vld [vmem:[#allocation7 + $0x770] sm:$0xff]
    %v327 = vld [vmem:[#allocation7 + $0x778] sm:$0xff]
    %v328 = vld [vmem:[#allocation7 + $0x780] sm:$0xff]
    %v329 = vld [vmem:[#allocation7 + $0x788] sm:$0xff]
    %v330 = vld [vmem:[#allocation7 + $0x790] sm:$0xff]
    %v331 = vld [vmem:[#allocation7 + $0x798] sm:$0xff]
    %v332 = vld [vmem:[#allocation7 + $0x7a0] sm:$0xff]
    %v333 = vld [vmem:[#allocation7 + $0x7a8] sm:$0xff]
    %v334 = vld [vmem:[#allocation7 + $0x7b0] sm:$0xff]
    %v335 = vld [vmem:[#allocation7 + $0x7b8] sm:$0xff]
    %v336 = vld [vmem:[#allocation7 + $0x7c0] sm:$0xff]
    %v337 = vld [vmem:[#allocation7 + $0x7c8] sm:$0xff]
    %v338 = vld [vmem:[#allocation7 + $0x7d0] sm:$0xff]
    %v339 = vld [vmem:[#allocation7 + $0x7d8] sm:$0xff]
    %v340 = vld [vmem:[#allocation7 + $0x7e0] sm:$0xff]
    %v341 = vld [vmem:[#allocation7 + $0x7e8] sm:$0xff]
    %v342 = vld [vmem:[#allocation7 + $0x7f0] sm:$0xff]
    %v343 = vld [vmem:[#allocation7 + $0x7f8] sm:$0xff]
    %v344 = vld [vmem:[#allocation9] sm:$0xf]
    %v346 = vlaneseq
    %v347 = vshrl.u32 %v346, 7
    %v348 = vsub.s32 0, %v347
    %v349 = vrot.slane %v344, %v348
    %v350 = vlaneseq
    %v351 = vshrl.u32 %v350, 7
    %v352 = vsub.s32 1, %v351
    %v353 = vrot.slane %v344, %v352
    %v354 = vlaneseq
    %v355 = vshrl.u32 %v354, 7
    %v356 = vsub.s32 2, %v355
    %v357 = vrot.slane %v344, %v356
    %v358 = vlaneseq
    %v359 = vshrl.u32 %v358, 7
    %v360 = vsub.s32 3, %v359
    %v361 = vrot.slane %v344, %v360
    %v374 = vunpack.c.l.b16 %v80
    %v375 = vunpack.c.h.b16 %v80
    %v376 = vunpack.c.l.b16 %v81
    %v377 = vunpack.c.h.b16 %v81
    %v378 = vunpack.c.l.b16 %v82
    %v379 = vunpack.c.h.b16 %v82
    %v380 = vunpack.c.l.b16 %v83
    %v381 = vunpack.c.h.b16 %v83
    %v382 = vunpack.c.l.b16 %v84
    %v383 = vunpack.c.h.b16 %v84
    %v384 = vunpack.c.l.b16 %v85
    %v385 = vunpack.c.h.b16 %v85
    %v386 = vunpack.c.l.b16 %v86
    %v387 = vunpack.c.h.b16 %v86
    %v388 = vunpack.c.l.b16 %v87
    %v389 = vunpack.c.h.b16 %v87
    %v390 = vpack.c.b16 %v382, %v374
    %v391 = vpack.c.b16 %v383, %v375
    %v392 = vpack.c.b16 %v384, %v376
    %v393 = vpack.c.b16 %v385, %v377
    %v394 = vpack.c.b16 %v386, %v378
    %v395 = vpack.c.b16 %v387, %v379
    %v396 = vpack.c.b16 %v388, %v380
    %v397 = vpack.c.b16 %v389, %v381
    %v662 = vunpack.c.l.b16 %v88
    %v663 = vunpack.c.h.b16 %v88
    %v664 = vunpack.c.l.b16 %v89
    %v665 = vunpack.c.h.b16 %v89
    %v666 = vunpack.c.l.b16 %v90
    %v667 = vunpack.c.h.b16 %v90
    %v668 = vunpack.c.l.b16 %v91
    %v669 = vunpack.c.h.b16 %v91
    %v670 = vunpack.c.l.b16 %v92
    %v671 = vunpack.c.h.b16 %v92
    %v672 = vunpack.c.l.b16 %v93
    %v673 = vunpack.c.h.b16 %v93
    %v674 = vunpack.c.l.b16 %v94
    %v675 = vunpack.c.h.b16 %v94
    %v676 = vunpack.c.l.b16 %v95
    %v677 = vunpack.c.h.b16 %v95
    %v678 = vunpack.c.l.b16 %v96
    %v679 = vunpack.c.h.b16 %v96
    %v680 = vunpack.c.l.b16 %v97
    %v681 = vunpack.c.h.b16 %v97
    %v682 = vunpack.c.l.b16 %v98
    %v683 = vunpack.c.h.b16 %v98
    %v684 = vunpack.c.l.b16 %v99
    %v685 = vunpack.c.h.b16 %v99
    %v686 = vunpack.c.l.b16 %v100
    %v687 = vunpack.c.h.b16 %v100
    %v688 = vunpack.c.l.b16 %v101
    %v689 = vunpack.c.h.b16 %v101
    %v690 = vunpack.c.l.b16 %v102
    %v691 = vunpack.c.h.b16 %v102
    %v692 = vunpack.c.l.b16 %v103
    %v693 = vunpack.c.h.b16 %v103
    %v694 = vunpack.c.l.b16 %v104
    %v695 = vunpack.c.h.b16 %v104
    %v696 = vunpack.c.l.b16 %v105
    %v697 = vunpack.c.h.b16 %v105
    %v698 = vunpack.c.l.b16 %v106
    %v699 = vunpack.c.h.b16 %v106
    %v700 = vunpack.c.l.b16 %v107
    %v701 = vunpack.c.h.b16 %v107
    %v702 = vunpack.c.l.b16 %v108
    %v703 = vunpack.c.h.b16 %v108
    %v704 = vunpack.c.l.b16 %v109
    %v705 = vunpack.c.h.b16 %v109
    %v706 = vunpack.c.l.b16 %v110
    %v707 = vunpack.c.h.b16 %v110
    %v708 = vunpack.c.l.b16 %v111
    %v709 = vunpack.c.h.b16 %v111
    %v710 = vunpack.c.l.b16 %v112
    %v711 = vunpack.c.h.b16 %v112
    %v712 = vunpack.c.l.b16 %v113
    %v713 = vunpack.c.h.b16 %v113
    %v714 = vunpack.c.l.b16 %v114
    %v715 = vunpack.c.h.b16 %v114
    %v716 = vunpack.c.l.b16 %v115
    %v717 = vunpack.c.h.b16 %v115
    %v718 = vunpack.c.l.b16 %v116
    %v719 = vunpack.c.h.b16 %v116
    %v720 = vunpack.c.l.b16 %v117
    %v721 = vunpack.c.h.b16 %v117
    %v722 = vunpack.c.l.b16 %v118
    %v723 = vunpack.c.h.b16 %v118
    %v724 = vunpack.c.l.b16 %v119
    %v725 = vunpack.c.h.b16 %v119
    %v726 = vunpack.c.l.b16 %v120
    %v727 = vunpack.c.h.b16 %v120
    %v728 = vunpack.c.l.b16 %v121
    %v729 = vunpack.c.h.b16 %v121
    %v730 = vunpack.c.l.b16 %v122
    %v731 = vunpack.c.h.b16 %v122
    %v732 = vunpack.c.l.b16 %v123
    %v733 = vunpack.c.h.b16 %v123
    %v734 = vunpack.c.l.b16 %v124
    %v735 = vunpack.c.h.b16 %v124
    %v736 = vunpack.c.l.b16 %v125
    %v737 = vunpack.c.h.b16 %v125
    %v738 = vunpack.c.l.b16 %v126
    %v739 = vunpack.c.h.b16 %v126
    %v740 = vunpack.c.l.b16 %v127
    %v741 = vunpack.c.h.b16 %v127
    %v742 = vunpack.c.l.b16 %v128
    %v743 = vunpack.c.h.b16 %v128
    %v744 = vunpack.c.l.b16 %v129
    %v745 = vunpack.c.h.b16 %v129
    %v746 = vunpack.c.l.b16 %v130
    %v747 = vunpack.c.h.b16 %v130
    %v748 = vunpack.c.l.b16 %v131
    %v749 = vunpack.c.h.b16 %v131
    %v750 = vunpack.c.l.b16 %v132
    %v751 = vunpack.c.h.b16 %v132
    %v752 = vunpack.c.l.b16 %v133
    %v753 = vunpack.c.h.b16 %v133
    %v754 = vunpack.c.l.b16 %v134
    %v755 = vunpack.c.h.b16 %v134
    %v756 = vunpack.c.l.b16 %v135
    %v757 = vunpack.c.h.b16 %v135
    %v758 = vunpack.c.l.b16 %v136
    %v759 = vunpack.c.h.b16 %v136
    %v760 = vunpack.c.l.b16 %v137
    %v761 = vunpack.c.h.b16 %v137
    %v762 = vunpack.c.l.b16 %v138
    %v763 = vunpack.c.h.b16 %v138
    %v764 = vunpack.c.l.b16 %v139
    %v765 = vunpack.c.h.b16 %v139
    %v766 = vunpack.c.l.b16 %v140
    %v767 = vunpack.c.h.b16 %v140
    %v768 = vunpack.c.l.b16 %v141
    %v769 = vunpack.c.h.b16 %v141
    %v770 = vunpack.c.l.b16 %v142
    %v771 = vunpack.c.h.b16 %v142
    %v772 = vunpack.c.l.b16 %v143
    %v773 = vunpack.c.h.b16 %v143
    %v774 = vunpack.c.l.b16 %v144
    %v775 = vunpack.c.h.b16 %v144
    %v776 = vunpack.c.l.b16 %v145
    %v777 = vunpack.c.h.b16 %v145
    %v778 = vunpack.c.l.b16 %v146
    %v779 = vunpack.c.h.b16 %v146
    %v780 = vunpack.c.l.b16 %v147
    %v781 = vunpack.c.h.b16 %v147
    %v782 = vunpack.c.l.b16 %v148
    %v783 = vunpack.c.h.b16 %v148
    %v784 = vunpack.c.l.b16 %v149
    %v785 = vunpack.c.h.b16 %v149
    %v786 = vunpack.c.l.b16 %v150
    %v787 = vunpack.c.h.b16 %v150
    %v788 = vunpack.c.l.b16 %v151
    %v789 = vunpack.c.h.b16 %v151
    %v790 = vunpack.c.l.b16 %v152
    %v791 = vunpack.c.h.b16 %v152
    %v792 = vunpack.c.l.b16 %v153
    %v793 = vunpack.c.h.b16 %v153
    %v794 = vunpack.c.l.b16 %v154
    %v795 = vunpack.c.h.b16 %v154
    %v796 = vunpack.c.l.b16 %v155
    %v797 = vunpack.c.h.b16 %v155
    %v798 = vunpack.c.l.b16 %v156
    %v799 = vunpack.c.h.b16 %v156
    %v800 = vunpack.c.l.b16 %v157
    %v801 = vunpack.c.h.b16 %v157
    %v802 = vunpack.c.l.b16 %v158
    %v803 = vunpack.c.h.b16 %v158
    %v804 = vunpack.c.l.b16 %v159
    %v805 = vunpack.c.h.b16 %v159
    %v806 = vunpack.c.l.b16 %v160
    %v807 = vunpack.c.h.b16 %v160
    %v808 = vunpack.c.l.b16 %v161
    %v809 = vunpack.c.h.b16 %v161
    %v810 = vunpack.c.l.b16 %v162
    %v811 = vunpack.c.h.b16 %v162
    %v812 = vunpack.c.l.b16 %v163
    %v813 = vunpack.c.h.b16 %v163
    %v814 = vunpack.c.l.b16 %v164
    %v815 = vunpack.c.h.b16 %v164
    %v816 = vunpack.c.l.b16 %v165
    %v817 = vunpack.c.h.b16 %v165
    %v818 = vunpack.c.l.b16 %v166
    %v819 = vunpack.c.h.b16 %v166
    %v820 = vunpack.c.l.b16 %v167
    %v821 = vunpack.c.h.b16 %v167
    %v822 = vunpack.c.l.b16 %v168
    %v823 = vunpack.c.h.b16 %v168
    %v824 = vunpack.c.l.b16 %v169
    %v825 = vunpack.c.h.b16 %v169
    %v826 = vunpack.c.l.b16 %v170
    %v827 = vunpack.c.h.b16 %v170
    %v828 = vunpack.c.l.b16 %v171
    %v829 = vunpack.c.h.b16 %v171
    %v830 = vunpack.c.l.b16 %v172
    %v831 = vunpack.c.h.b16 %v172
    %v832 = vunpack.c.l.b16 %v173
    %v833 = vunpack.c.h.b16 %v173
    %v834 = vunpack.c.l.b16 %v174
    %v835 = vunpack.c.h.b16 %v174
    %v836 = vunpack.c.l.b16 %v175
    %v837 = vunpack.c.h.b16 %v175
    %v838 = vunpack.c.l.b16 %v176
    %v839 = vunpack.c.h.b16 %v176
    %v840 = vunpack.c.l.b16 %v177
    %v841 = vunpack.c.h.b16 %v177
    %v842 = vunpack.c.l.b16 %v178
    %v843 = vunpack.c.h.b16 %v178
    %v844 = vunpack.c.l.b16 %v179
    %v845 = vunpack.c.h.b16 %v179
    %v846 = vunpack.c.l.b16 %v180
    %v847 = vunpack.c.h.b16 %v180
    %v848 = vunpack.c.l.b16 %v181
    %v849 = vunpack.c.h.b16 %v181
    %v850 = vunpack.c.l.b16 %v182
    %v851 = vunpack.c.h.b16 %v182
    %v852 = vunpack.c.l.b16 %v183
    %v853 = vunpack.c.h.b16 %v183
    %v854 = vunpack.c.l.b16 %v184
    %v855 = vunpack.c.h.b16 %v184
    %v856 = vunpack.c.l.b16 %v185
    %v857 = vunpack.c.h.b16 %v185
    %v858 = vunpack.c.l.b16 %v186
    %v859 = vunpack.c.h.b16 %v186
    %v860 = vunpack.c.l.b16 %v187
    %v861 = vunpack.c.h.b16 %v187
    %v862 = vunpack.c.l.b16 %v188
    %v863 = vunpack.c.h.b16 %v188
    %v864 = vunpack.c.l.b16 %v189
    %v865 = vunpack.c.h.b16 %v189
    %v866 = vunpack.c.l.b16 %v190
    %v867 = vunpack.c.h.b16 %v190
    %v868 = vunpack.c.l.b16 %v191
    %v869 = vunpack.c.h.b16 %v191
    %v870 = vunpack.c.l.b16 %v192
    %v871 = vunpack.c.h.b16 %v192
    %v872 = vunpack.c.l.b16 %v193
    %v873 = vunpack.c.h.b16 %v193
    %v874 = vunpack.c.l.b16 %v194
    %v875 = vunpack.c.h.b16 %v194
    %v876 = vunpack.c.l.b16 %v195
    %v877 = vunpack.c.h.b16 %v195
    %v878 = vunpack.c.l.b16 %v196
    %v879 = vunpack.c.h.b16 %v196
    %v880 = vunpack.c.l.b16 %v197
    %v881 = vunpack.c.h.b16 %v197
    %v882 = vunpack.c.l.b16 %v198
    %v883 = vunpack.c.h.b16 %v198
    %v884 = vunpack.c.l.b16 %v199
    %v885 = vunpack.c.h.b16 %v199
    %v886 = vunpack.c.l.b16 %v200
    %v887 = vunpack.c.h.b16 %v200
    %v888 = vunpack.c.l.b16 %v201
    %v889 = vunpack.c.h.b16 %v201
    %v890 = vunpack.c.l.b16 %v202
    %v891 = vunpack.c.h.b16 %v202
    %v892 = vunpack.c.l.b16 %v203
    %v893 = vunpack.c.h.b16 %v203
    %v894 = vunpack.c.l.b16 %v204
    %v895 = vunpack.c.h.b16 %v204
    %v896 = vunpack.c.l.b16 %v205
    %v897 = vunpack.c.h.b16 %v205
    %v898 = vunpack.c.l.b16 %v206
    %v899 = vunpack.c.h.b16 %v206
    %v900 = vunpack.c.l.b16 %v207
    %v901 = vunpack.c.h.b16 %v207
    %v902 = vunpack.c.l.b16 %v208
    %v903 = vunpack.c.h.b16 %v208
    %v904 = vunpack.c.l.b16 %v209
    %v905 = vunpack.c.h.b16 %v209
    %v906 = vunpack.c.l.b16 %v210
    %v907 = vunpack.c.h.b16 %v210
    %v908 = vunpack.c.l.b16 %v211
    %v909 = vunpack.c.h.b16 %v211
    %v910 = vunpack.c.l.b16 %v212
    %v911 = vunpack.c.h.b16 %v212
    %v912 = vunpack.c.l.b16 %v213
    %v913 = vunpack.c.h.b16 %v213
    %v914 = vunpack.c.l.b16 %v214
    %v915 = vunpack.c.h.b16 %v214
    %v916 = vunpack.c.l.b16 %v215
    %v917 = vunpack.c.h.b16 %v215
    %v918 = vunpack.c.l.b16 %v216
    %v919 = vunpack.c.h.b16 %v216
    %v920 = vunpack.c.l.b16 %v217
    %v921 = vunpack.c.h.b16 %v217
    %v922 = vunpack.c.l.b16 %v218
    %v923 = vunpack.c.h.b16 %v218
    %v924 = vunpack.c.l.b16 %v219
    %v925 = vunpack.c.h.b16 %v219
    %v926 = vunpack.c.l.b16 %v220
    %v927 = vunpack.c.h.b16 %v220
    %v928 = vunpack.c.l.b16 %v221
    %v929 = vunpack.c.h.b16 %v221
    %v930 = vunpack.c.l.b16 %v222
    %v931 = vunpack.c.h.b16 %v222
    %v932 = vunpack.c.l.b16 %v223
    %v933 = vunpack.c.h.b16 %v223
    %v934 = vunpack.c.l.b16 %v224
    %v935 = vunpack.c.h.b16 %v224
    %v936 = vunpack.c.l.b16 %v225
    %v937 = vunpack.c.h.b16 %v225
    %v938 = vunpack.c.l.b16 %v226
    %v939 = vunpack.c.h.b16 %v226
    %v940 = vunpack.c.l.b16 %v227
    %v941 = vunpack.c.h.b16 %v227
    %v942 = vunpack.c.l.b16 %v228
    %v943 = vunpack.c.h.b16 %v228
    %v944 = vunpack.c.l.b16 %v229
    %v945 = vunpack.c.h.b16 %v229
    %v946 = vunpack.c.l.b16 %v230
    %v947 = vunpack.c.h.b16 %v230
    %v948 = vunpack.c.l.b16 %v231
    %v949 = vunpack.c.h.b16 %v231
    %v950 = vunpack.c.l.b16 %v232
    %v951 = vunpack.c.h.b16 %v232
    %v952 = vunpack.c.l.b16 %v233
    %v953 = vunpack.c.h.b16 %v233
    %v954 = vunpack.c.l.b16 %v234
    %v955 = vunpack.c.h.b16 %v234
    %v956 = vunpack.c.l.b16 %v235
    %v957 = vunpack.c.h.b16 %v235
    %v958 = vunpack.c.l.b16 %v236
    %v959 = vunpack.c.h.b16 %v236
    %v960 = vunpack.c.l.b16 %v237
    %v961 = vunpack.c.h.b16 %v237
    %v962 = vunpack.c.l.b16 %v238
    %v963 = vunpack.c.h.b16 %v238
    %v964 = vunpack.c.l.b16 %v239
    %v965 = vunpack.c.h.b16 %v239
    %v966 = vunpack.c.l.b16 %v240
    %v967 = vunpack.c.h.b16 %v240
    %v968 = vunpack.c.l.b16 %v241
    %v969 = vunpack.c.h.b16 %v241
    %v970 = vunpack.c.l.b16 %v242
    %v971 = vunpack.c.h.b16 %v242
    %v972 = vunpack.c.l.b16 %v243
    %v973 = vunpack.c.h.b16 %v243
    %v974 = vunpack.c.l.b16 %v244
    %v975 = vunpack.c.h.b16 %v244
    %v976 = vunpack.c.l.b16 %v245
    %v977 = vunpack.c.h.b16 %v245
    %v978 = vunpack.c.l.b16 %v246
    %v979 = vunpack.c.h.b16 %v246
    %v980 = vunpack.c.l.b16 %v247
    %v981 = vunpack.c.h.b16 %v247
    %v982 = vunpack.c.l.b16 %v248
    %v983 = vunpack.c.h.b16 %v248
    %v984 = vunpack.c.l.b16 %v249
    %v985 = vunpack.c.h.b16 %v249
    %v986 = vunpack.c.l.b16 %v250
    %v987 = vunpack.c.h.b16 %v250
    %v988 = vunpack.c.l.b16 %v251
    %v989 = vunpack.c.h.b16 %v251
    %v990 = vunpack.c.l.b16 %v252
    %v991 = vunpack.c.h.b16 %v252
    %v992 = vunpack.c.l.b16 %v253
    %v993 = vunpack.c.h.b16 %v253
    %v994 = vunpack.c.l.b16 %v254
    %v995 = vunpack.c.h.b16 %v254
    %v996 = vunpack.c.l.b16 %v255
    %v997 = vunpack.c.h.b16 %v255
    %v998 = vunpack.c.l.b16 %v256
    %v999 = vunpack.c.h.b16 %v256
    %v1000 = vunpack.c.l.b16 %v257
    %v1001 = vunpack.c.h.b16 %v257
    %v1002 = vunpack.c.l.b16 %v258
    %v1003 = vunpack.c.h.b16 %v258
    %v1004 = vunpack.c.l.b16 %v259
    %v1005 = vunpack.c.h.b16 %v259
    %v1006 = vunpack.c.l.b16 %v260
    %v1007 = vunpack.c.h.b16 %v260
    %v1008 = vunpack.c.l.b16 %v261
    %v1009 = vunpack.c.h.b16 %v261
    %v1010 = vunpack.c.l.b16 %v262
    %v1011 = vunpack.c.h.b16 %v262
    %v1012 = vunpack.c.l.b16 %v263
    %v1013 = vunpack.c.h.b16 %v263
    %v1014 = vunpack.c.l.b16 %v264
    %v1015 = vunpack.c.h.b16 %v264
    %v1016 = vunpack.c.l.b16 %v265
    %v1017 = vunpack.c.h.b16 %v265
    %v1018 = vunpack.c.l.b16 %v266
    %v1019 = vunpack.c.h.b16 %v266
    %v1020 = vunpack.c.l.b16 %v267
    %v1021 = vunpack.c.h.b16 %v267
    %v1022 = vunpack.c.l.b16 %v268
    %v1023 = vunpack.c.h.b16 %v268
    %v1024 = vunpack.c.l.b16 %v269
    %v1025 = vunpack.c.h.b16 %v269
    %v1026 = vunpack.c.l.b16 %v270
    %v1027 = vunpack.c.h.b16 %v270
    %v1028 = vunpack.c.l.b16 %v271
    %v1029 = vunpack.c.h.b16 %v271
    %v1030 = vunpack.c.l.b16 %v272
    %v1031 = vunpack.c.h.b16 %v272
    %v1032 = vunpack.c.l.b16 %v273
    %v1033 = vunpack.c.h.b16 %v273
    %v1034 = vunpack.c.l.b16 %v274
    %v1035 = vunpack.c.h.b16 %v274
    %v1036 = vunpack.c.l.b16 %v275
    %v1037 = vunpack.c.h.b16 %v275
    %v1038 = vunpack.c.l.b16 %v276
    %v1039 = vunpack.c.h.b16 %v276
    %v1040 = vunpack.c.l.b16 %v277
    %v1041 = vunpack.c.h.b16 %v277
    %v1042 = vunpack.c.l.b16 %v278
    %v1043 = vunpack.c.h.b16 %v278
    %v1044 = vunpack.c.l.b16 %v279
    %v1045 = vunpack.c.h.b16 %v279
    %v1046 = vunpack.c.l.b16 %v280
    %v1047 = vunpack.c.h.b16 %v280
    %v1048 = vunpack.c.l.b16 %v281
    %v1049 = vunpack.c.h.b16 %v281
    %v1050 = vunpack.c.l.b16 %v282
    %v1051 = vunpack.c.h.b16 %v282
    %v1052 = vunpack.c.l.b16 %v283
    %v1053 = vunpack.c.h.b16 %v283
    %v1054 = vunpack.c.l.b16 %v284
    %v1055 = vunpack.c.h.b16 %v284
    %v1056 = vunpack.c.l.b16 %v285
    %v1057 = vunpack.c.h.b16 %v285
    %v1058 = vunpack.c.l.b16 %v286
    %v1059 = vunpack.c.h.b16 %v286
    %v1060 = vunpack.c.l.b16 %v287
    %v1061 = vunpack.c.h.b16 %v287
    %v1062 = vunpack.c.l.b16 %v288
    %v1063 = vunpack.c.h.b16 %v288
    %v1064 = vunpack.c.l.b16 %v289
    %v1065 = vunpack.c.h.b16 %v289
    %v1066 = vunpack.c.l.b16 %v290
    %v1067 = vunpack.c.h.b16 %v290
    %v1068 = vunpack.c.l.b16 %v291
    %v1069 = vunpack.c.h.b16 %v291
    %v1070 = vunpack.c.l.b16 %v292
    %v1071 = vunpack.c.h.b16 %v292
    %v1072 = vunpack.c.l.b16 %v293
    %v1073 = vunpack.c.h.b16 %v293
    %v1074 = vunpack.c.l.b16 %v294
    %v1075 = vunpack.c.h.b16 %v294
    %v1076 = vunpack.c.l.b16 %v295
    %v1077 = vunpack.c.h.b16 %v295
    %v1078 = vunpack.c.l.b16 %v296
    %v1079 = vunpack.c.h.b16 %v296
    %v1080 = vunpack.c.l.b16 %v297
    %v1081 = vunpack.c.h.b16 %v297
    %v1082 = vunpack.c.l.b16 %v298
    %v1083 = vunpack.c.h.b16 %v298
    %v1084 = vunpack.c.l.b16 %v299
    %v1085 = vunpack.c.h.b16 %v299
    %v1086 = vunpack.c.l.b16 %v300
    %v1087 = vunpack.c.h.b16 %v300
    %v1088 = vunpack.c.l.b16 %v301
    %v1089 = vunpack.c.h.b16 %v301
    %v1090 = vunpack.c.l.b16 %v302
    %v1091 = vunpack.c.h.b16 %v302
    %v1092 = vunpack.c.l.b16 %v303
    %v1093 = vunpack.c.h.b16 %v303
    %v1094 = vunpack.c.l.b16 %v304
    %v1095 = vunpack.c.h.b16 %v304
    %v1096 = vunpack.c.l.b16 %v305
    %v1097 = vunpack.c.h.b16 %v305
    %v1098 = vunpack.c.l.b16 %v306
    %v1099 = vunpack.c.h.b16 %v306
    %v1100 = vunpack.c.l.b16 %v307
    %v1101 = vunpack.c.h.b16 %v307
    %v1102 = vunpack.c.l.b16 %v308
    %v1103 = vunpack.c.h.b16 %v308
    %v1104 = vunpack.c.l.b16 %v309
    %v1105 = vunpack.c.h.b16 %v309
    %v1106 = vunpack.c.l.b16 %v310
    %v1107 = vunpack.c.h.b16 %v310
    %v1108 = vunpack.c.l.b16 %v311
    %v1109 = vunpack.c.h.b16 %v311
    %v1110 = vunpack.c.l.b16 %v312
    %v1111 = vunpack.c.h.b16 %v312
    %v1112 = vunpack.c.l.b16 %v313
    %v1113 = vunpack.c.h.b16 %v313
    %v1114 = vunpack.c.l.b16 %v314
    %v1115 = vunpack.c.h.b16 %v314
    %v1116 = vunpack.c.l.b16 %v315
    %v1117 = vunpack.c.h.b16 %v315
    %v1118 = vunpack.c.l.b16 %v316
    %v1119 = vunpack.c.h.b16 %v316
    %v1120 = vunpack.c.l.b16 %v317
    %v1121 = vunpack.c.h.b16 %v317
    %v1122 = vunpack.c.l.b16 %v318
    %v1123 = vunpack.c.h.b16 %v318
    %v1124 = vunpack.c.l.b16 %v319
    %v1125 = vunpack.c.h.b16 %v319
    %v1126 = vunpack.c.l.b16 %v320
    %v1127 = vunpack.c.h.b16 %v320
    %v1128 = vunpack.c.l.b16 %v321
    %v1129 = vunpack.c.h.b16 %v321
    %v1130 = vunpack.c.l.b16 %v322
    %v1131 = vunpack.c.h.b16 %v322
    %v1132 = vunpack.c.l.b16 %v323
    %v1133 = vunpack.c.h.b16 %v323
    %v1134 = vunpack.c.l.b16 %v324
    %v1135 = vunpack.c.h.b16 %v324
    %v1136 = vunpack.c.l.b16 %v325
    %v1137 = vunpack.c.h.b16 %v325
    %v1138 = vunpack.c.l.b16 %v326
    %v1139 = vunpack.c.h.b16 %v326
    %v1140 = vunpack.c.l.b16 %v327
    %v1141 = vunpack.c.h.b16 %v327
    %v1142 = vunpack.c.l.b16 %v328
    %v1143 = vunpack.c.h.b16 %v328
    %v1144 = vunpack.c.l.b16 %v329
    %v1145 = vunpack.c.h.b16 %v329
    %v1146 = vunpack.c.l.b16 %v330
    %v1147 = vunpack.c.h.b16 %v330
    %v1148 = vunpack.c.l.b16 %v331
    %v1149 = vunpack.c.h.b16 %v331
    %v1150 = vunpack.c.l.b16 %v332
    %v1151 = vunpack.c.h.b16 %v332
    %v1152 = vunpack.c.l.b16 %v333
    %v1153 = vunpack.c.h.b16 %v333
    %v1154 = vunpack.c.l.b16 %v334
    %v1155 = vunpack.c.h.b16 %v334
    %v1156 = vunpack.c.l.b16 %v335
    %v1157 = vunpack.c.h.b16 %v335
    %v1158 = vunpack.c.l.b16 %v336
    %v1159 = vunpack.c.h.b16 %v336
    %v1160 = vunpack.c.l.b16 %v337
    %v1161 = vunpack.c.h.b16 %v337
    %v1162 = vunpack.c.l.b16 %v338
    %v1163 = vunpack.c.h.b16 %v338
    %v1164 = vunpack.c.l.b16 %v339
    %v1165 = vunpack.c.h.b16 %v339
    %v1166 = vunpack.c.l.b16 %v340
    %v1167 = vunpack.c.h.b16 %v340
    %v1168 = vunpack.c.l.b16 %v341
    %v1169 = vunpack.c.h.b16 %v341
    %v1170 = vunpack.c.l.b16 %v342
    %v1171 = vunpack.c.h.b16 %v342
    %v1172 = vunpack.c.l.b16 %v343
    %v1173 = vunpack.c.h.b16 %v343
    %v1174 = vpack.c.b16 %v666, %v662
    %v1175 = vpack.c.b16 %v667, %v663
    %v1176 = vpack.c.b16 %v668, %v664
    %v1177 = vpack.c.b16 %v669, %v665
    %v1178 = vpack.c.b16 %v674, %v670
    %v1179 = vpack.c.b16 %v675, %v671
    %v1180 = vpack.c.b16 %v676, %v672
    %v1181 = vpack.c.b16 %v677, %v673
    %v1182 = vpack.c.b16 %v682, %v678
    %v1183 = vpack.c.b16 %v683, %v679
    %v1184 = vpack.c.b16 %v684, %v680
    %v1185 = vpack.c.b16 %v685, %v681
    %v1186 = vpack.c.b16 %v690, %v686
    %v1187 = vpack.c.b16 %v691, %v687
    %v1188 = vpack.c.b16 %v692, %v688
    %v1189 = vpack.c.b16 %v693, %v689
    %v1190 = vpack.c.b16 %v698, %v694
    %v1191 = vpack.c.b16 %v699, %v695
    %v1192 = vpack.c.b16 %v700, %v696
    %v1193 = vpack.c.b16 %v701, %v697
    %v1194 = vpack.c.b16 %v706, %v702
    %v1195 = vpack.c.b16 %v707, %v703
    %v1196 = vpack.c.b16 %v708, %v704
    %v1197 = vpack.c.b16 %v709, %v705
    %v1198 = vpack.c.b16 %v714, %v710
    %v1199 = vpack.c.b16 %v715, %v711
    %v1200 = vpack.c.b16 %v716, %v712
    %v1201 = vpack.c.b16 %v717, %v713
    %v1202 = vpack.c.b16 %v722, %v718
    %v1203 = vpack.c.b16 %v723, %v719
    %v1204 = vpack.c.b16 %v724, %v720
    %v1205 = vpack.c.b16 %v725, %v721
    %v1206 = vpack.c.b16 %v730, %v726
    %v1207 = vpack.c.b16 %v731, %v727
    %v1208 = vpack.c.b16 %v732, %v728
    %v1209 = vpack.c.b16 %v733, %v729
    %v1210 = vpack.c.b16 %v738, %v734
    %v1211 = vpack.c.b16 %v739, %v735
    %v1212 = vpack.c.b16 %v740, %v736
    %v1213 = vpack.c.b16 %v741, %v737
    %v1214 = vpack.c.b16 %v746, %v742
    %v1215 = vpack.c.b16 %v747, %v743
    %v1216 = vpack.c.b16 %v748, %v744
    %v1217 = vpack.c.b16 %v749, %v745
    %v1218 = vpack.c.b16 %v754, %v750
    %v1219 = vpack.c.b16 %v755, %v751
    %v1220 = vpack.c.b16 %v756, %v752
    %v1221 = vpack.c.b16 %v757, %v753
    %v1222 = vpack.c.b16 %v762, %v758
    %v1223 = vpack.c.b16 %v763, %v759
    %v1224 = vpack.c.b16 %v764, %v760
    %v1225 = vpack.c.b16 %v765, %v761
    %v1226 = vpack.c.b16 %v770, %v766
    %v1227 = vpack.c.b16 %v771, %v767
    %v1228 = vpack.c.b16 %v772, %v768
    %v1229 = vpack.c.b16 %v773, %v769
    %v1230 = vpack.c.b16 %v778, %v774
    %v1231 = vpack.c.b16 %v779, %v775
    %v1232 = vpack.c.b16 %v780, %v776
    %v1233 = vpack.c.b16 %v781, %v777
    %v1234 = vpack.c.b16 %v786, %v782
    %v1235 = vpack.c.b16 %v787, %v783
    %v1236 = vpack.c.b16 %v788, %v784
    %v1237 = vpack.c.b16 %v789, %v785
    %v1238 = vpack.c.b16 %v794, %v790
    %v1239 = vpack.c.b16 %v795, %v791
    %v1240 = vpack.c.b16 %v796, %v792
    %v1241 = vpack.c.b16 %v797, %v793
    %v1242 = vpack.c.b16 %v802, %v798
    %v1243 = vpack.c.b16 %v803, %v799
    %v1244 = vpack.c.b16 %v804, %v800
    %v1245 = vpack.c.b16 %v805, %v801
    %v1246 = vpack.c.b16 %v810, %v806
    %v1247 = vpack.c.b16 %v811, %v807
    %v1248 = vpack.c.b16 %v812, %v808
    %v1249 = vpack.c.b16 %v813, %v809
    %v1250 = vpack.c.b16 %v818, %v814
    %v1251 = vpack.c.b16 %v819, %v815
    %v1252 = vpack.c.b16 %v820, %v816
    %v1253 = vpack.c.b16 %v821, %v817
    %v1254 = vpack.c.b16 %v826, %v822
    %v1255 = vpack.c.b16 %v827, %v823
    %v1256 = vpack.c.b16 %v828, %v824
    %v1257 = vpack.c.b16 %v829, %v825
    %v1258 = vpack.c.b16 %v834, %v830
    %v1259 = vpack.c.b16 %v835, %v831
    %v1260 = vpack.c.b16 %v836, %v832
    %v1261 = vpack.c.b16 %v837, %v833
    %v1262 = vpack.c.b16 %v842, %v838
    %v1263 = vpack.c.b16 %v843, %v839
    %v1264 = vpack.c.b16 %v844, %v840
    %v1265 = vpack.c.b16 %v845, %v841
    %v1266 = vpack.c.b16 %v850, %v846
    %v1267 = vpack.c.b16 %v851, %v847
    %v1268 = vpack.c.b16 %v852, %v848
    %v1269 = vpack.c.b16 %v853, %v849
    %v1270 = vpack.c.b16 %v858, %v854
    %v1271 = vpack.c.b16 %v859, %v855
    %v1272 = vpack.c.b16 %v860, %v856
    %v1273 = vpack.c.b16 %v861, %v857
    %v1274 = vpack.c.b16 %v866, %v862
    %v1275 = vpack.c.b16 %v867, %v863
    %v1276 = vpack.c.b16 %v868, %v864
    %v1277 = vpack.c.b16 %v869, %v865
    %v1278 = vpack.c.b16 %v874, %v870
    %v1279 = vpack.c.b16 %v875, %v871
    %v1280 = vpack.c.b16 %v876, %v872
    %v1281 = vpack.c.b16 %v877, %v873
    %v1282 = vpack.c.b16 %v882, %v878
    %v1283 = vpack.c.b16 %v883, %v879
    %v1284 = vpack.c.b16 %v884, %v880
    %v1285 = vpack.c.b16 %v885, %v881
    %v1286 = vpack.c.b16 %v890, %v886
    %v1287 = vpack.c.b16 %v891, %v887
    %v1288 = vpack.c.b16 %v892, %v888
    %v1289 = vpack.c.b16 %v893, %v889
    %v1290 = vpack.c.b16 %v898, %v894
    %v1291 = vpack.c.b16 %v899, %v895
    %v1292 = vpack.c.b16 %v900, %v896
    %v1293 = vpack.c.b16 %v901, %v897
    %v1294 = vpack.c.b16 %v906, %v902
    %v1295 = vpack.c.b16 %v907, %v903
    %v1296 = vpack.c.b16 %v908, %v904
    %v1297 = vpack.c.b16 %v909, %v905
    %v1298 = vpack.c.b16 %v914, %v910
    %v1299 = vpack.c.b16 %v915, %v911
    %v1300 = vpack.c.b16 %v916, %v912
    %v1301 = vpack.c.b16 %v917, %v913
    %v1302 = vpack.c.b16 %v922, %v918
    %v1303 = vpack.c.b16 %v923, %v919
    %v1304 = vpack.c.b16 %v924, %v920
    %v1305 = vpack.c.b16 %v925, %v921
    %v1306 = vpack.c.b16 %v930, %v926
    %v1307 = vpack.c.b16 %v931, %v927
    %v1308 = vpack.c.b16 %v932, %v928
    %v1309 = vpack.c.b16 %v933, %v929
    %v1310 = vpack.c.b16 %v938, %v934
    %v1311 = vpack.c.b16 %v939, %v935
    %v1312 = vpack.c.b16 %v940, %v936
    %v1313 = vpack.c.b16 %v941, %v937
    %v1314 = vpack.c.b16 %v946, %v942
    %v1315 = vpack.c.b16 %v947, %v943
    %v1316 = vpack.c.b16 %v948, %v944
    %v1317 = vpack.c.b16 %v949, %v945
    %v1318 = vpack.c.b16 %v954, %v950
    %v1319 = vpack.c.b16 %v955, %v951
    %v1320 = vpack.c.b16 %v956, %v952
    %v1321 = vpack.c.b16 %v957, %v953
    %v1322 = vpack.c.b16 %v962, %v958
    %v1323 = vpack.c.b16 %v963, %v959
    %v1324 = vpack.c.b16 %v964, %v960
    %v1325 = vpack.c.b16 %v965, %v961
    %v1326 = vpack.c.b16 %v970, %v966
    %v1327 = vpack.c.b16 %v971, %v967
    %v1328 = vpack.c.b16 %v972, %v968
    %v1329 = vpack.c.b16 %v973, %v969
    %v1330 = vpack.c.b16 %v978, %v974
    %v1331 = vpack.c.b16 %v979, %v975
    %v1332 = vpack.c.b16 %v980, %v976
    %v1333 = vpack.c.b16 %v981, %v977
    %v1334 = vpack.c.b16 %v986, %v982
    %v1335 = vpack.c.b16 %v987, %v983
    %v1336 = vpack.c.b16 %v988, %v984
    %v1337 = vpack.c.b16 %v989, %v985
    %v1338 = vpack.c.b16 %v994, %v990
    %v1339 = vpack.c.b16 %v995, %v991
    %v1340 = vpack.c.b16 %v996, %v992
    %v1341 = vpack.c.b16 %v997, %v993
    %v1342 = vpack.c.b16 %v1002, %v998
    %v1343 = vpack.c.b16 %v1003, %v999
    %v1344 = vpack.c.b16 %v1004, %v1000
    %v1345 = vpack.c.b16 %v1005, %v1001
    %v1346 = vpack.c.b16 %v1010, %v1006
    %v1347 = vpack.c.b16 %v1011, %v1007
    %v1348 = vpack.c.b16 %v1012, %v1008
    %v1349 = vpack.c.b16 %v1013, %v1009
    %v1350 = vpack.c.b16 %v1018, %v1014
    %v1351 = vpack.c.b16 %v1019, %v1015
    %v1352 = vpack.c.b16 %v1020, %v1016
    %v1353 = vpack.c.b16 %v1021, %v1017
    %v1354 = vpack.c.b16 %v1026, %v1022
    %v1355 = vpack.c.b16 %v1027, %v1023
    %v1356 = vpack.c.b16 %v1028, %v1024
    %v1357 = vpack.c.b16 %v1029, %v1025
    %v1358 = vpack.c.b16 %v1034, %v1030
    %v1359 = vpack.c.b16 %v1035, %v1031
    %v1360 = vpack.c.b16 %v1036, %v1032
    %v1361 = vpack.c.b16 %v1037, %v1033
    %v1362 = vpack.c.b16 %v1042, %v1038
    %v1363 = vpack.c.b16 %v1043, %v1039
    %v1364 = vpack.c.b16 %v1044, %v1040
    %v1365 = vpack.c.b16 %v1045, %v1041
    %v1366 = vpack.c.b16 %v1050, %v1046
    %v1367 = vpack.c.b16 %v1051, %v1047
    %v1368 = vpack.c.b16 %v1052, %v1048
    %v1369 = vpack.c.b16 %v1053, %v1049
    %v1370 = vpack.c.b16 %v1058, %v1054
    %v1371 = vpack.c.b16 %v1059, %v1055
    %v1372 = vpack.c.b16 %v1060, %v1056
    %v1373 = vpack.c.b16 %v1061, %v1057
    %v1374 = vpack.c.b16 %v1066, %v1062
    %v1375 = vpack.c.b16 %v1067, %v1063
    %v1376 = vpack.c.b16 %v1068, %v1064
    %v1377 = vpack.c.b16 %v1069, %v1065
    %v1378 = vpack.c.b16 %v1074, %v1070
    %v1379 = vpack.c.b16 %v1075, %v1071
    %v1380 = vpack.c.b16 %v1076, %v1072
    %v1381 = vpack.c.b16 %v1077, %v1073
    %v1382 = vpack.c.b16 %v1082, %v1078
    %v1383 = vpack.c.b16 %v1083, %v1079
    %v1384 = vpack.c.b16 %v1084, %v1080
    %v1385 = vpack.c.b16 %v1085, %v1081
    %v1386 = vpack.c.b16 %v1090, %v1086
    %v1387 = vpack.c.b16 %v1091, %v1087
    %v1388 = vpack.c.b16 %v1092, %v1088
    %v1389 = vpack.c.b16 %v1093, %v1089
    %v1390 = vpack.c.b16 %v1098, %v1094
    %v1391 = vpack.c.b16 %v1099, %v1095
    %v1392 = vpack.c.b16 %v1100, %v1096
    %v1393 = vpack.c.b16 %v1101, %v1097
    %v1394 = vpack.c.b16 %v1106, %v1102
    %v1395 = vpack.c.b16 %v1107, %v1103
    %v1396 = vpack.c.b16 %v1108, %v1104
    %v1397 = vpack.c.b16 %v1109, %v1105
    %v1398 = vpack.c.b16 %v1114, %v1110
    %v1399 = vpack.c.b16 %v1115, %v1111
    %v1400 = vpack.c.b16 %v1116, %v1112
    %v1401 = vpack.c.b16 %v1117, %v1113
    %v1402 = vpack.c.b16 %v1122, %v1118
    %v1403 = vpack.c.b16 %v1123, %v1119
    %v1404 = vpack.c.b16 %v1124, %v1120
    %v1405 = vpack.c.b16 %v1125, %v1121
    %v1406 = vpack.c.b16 %v1130, %v1126
    %v1407 = vpack.c.b16 %v1131, %v1127
    %v1408 = vpack.c.b16 %v1132, %v1128
    %v1409 = vpack.c.b16 %v1133, %v1129
    %v1410 = vpack.c.b16 %v1138, %v1134
    %v1411 = vpack.c.b16 %v1139, %v1135
    %v1412 = vpack.c.b16 %v1140, %v1136
    %v1413 = vpack.c.b16 %v1141, %v1137
    %v1414 = vpack.c.b16 %v1146, %v1142
    %v1415 = vpack.c.b16 %v1147, %v1143
    %v1416 = vpack.c.b16 %v1148, %v1144
    %v1417 = vpack.c.b16 %v1149, %v1145
    %v1418 = vpack.c.b16 %v1154, %v1150
    %v1419 = vpack.c.b16 %v1155, %v1151
    %v1420 = vpack.c.b16 %v1156, %v1152
    %v1421 = vpack.c.b16 %v1157, %v1153
    %v1422 = vpack.c.b16 %v1162, %v1158
    %v1423 = vpack.c.b16 %v1163, %v1159
    %v1424 = vpack.c.b16 %v1164, %v1160
    %v1425 = vpack.c.b16 %v1165, %v1161
    %v1426 = vpack.c.b16 %v1170, %v1166
    %v1427 = vpack.c.b16 %v1171, %v1167
    %v1428 = vpack.c.b16 %v1172, %v1168
    %v1429 = vpack.c.b16 %v1173, %v1169
    %1686 = vmatprep.subr.bf16.mxu0 %v1203
    %1687 = vmatpush1.bf16.msra.mxu0 %v1202
    %1688 = vmatprep.subr.bf16.mxu0 %v1199
    %1689 = vmatpush1.bf16.msra.mxu0 %v1198
    %1690 = vmatprep.subr.bf16.mxu0 %v1195
    %1691 = vmatpush1.bf16.msra.mxu0 %v1194
    %1692 = vmatprep.subr.bf16.mxu0 %v1191
    %1693 = vmatpush1.bf16.msra.mxu0 %v1190
    %1694 = vmatprep.subr.bf16.mxu0 %v1187
    %1695 = vmatpush1.bf16.msra.mxu0 %v1186
    %1696 = vmatprep.subr.bf16.mxu0 %v1183
    %1697 = vmatpush1.bf16.msra.mxu0 %v1182
    %1698 = vmatprep.subr.bf16.mxu0 %v1179
    %1699 = vmatpush1.bf16.msra.mxu0 %v1178
    %1700 = vmatprep.subr.bf16.mxu0 %v1175
    %1701 = vmatpush1.bf16.msra.mxu0 %v1174
    %1702 = vmatprep.subr.bf16.mxu0 %v1235
    %1703 = vmatpush2.bf16.msra.mxu0 %v1234
    %1704 = vmatprep.subr.bf16.mxu0 %v1231
    %1705 = vmatpush2.bf16.msra.mxu0 %v1230
    %1706 = vmatprep.subr.bf16.mxu0 %v1227
    %1707 = vmatpush2.bf16.msra.mxu0 %v1226
    %1708 = vmatprep.subr.bf16.mxu0 %v1223
    %1709 = vmatpush2.bf16.msra.mxu0 %v1222
    %1710 = vmatprep.subr.bf16.mxu0 %v1219
    %1711 = vmatpush2.bf16.msra.mxu0 %v1218
    %1712 = vmatprep.subr.bf16.mxu0 %v1215
    %1713 = vmatpush2.bf16.msra.mxu0 %v1214
    %1714 = vmatprep.subr.bf16.mxu0 %v1211
    %1715 = vmatpush2.bf16.msra.mxu0 %v1210
    %1716 = vmatprep.subr.bf16.mxu0 %v1207
    %1717 = vmatpush2.bf16.msra.mxu0 %v1206
    %1718 = vmatprep.mubr.bf16.mxu0 %v391
    %1719 = vmatmul.mubr.bf16.gmra.mxu0 %v390
    %v1720 = vpop.f32.mrf.mxu0
    %v1721 = vadd.f32 %v349, %v1720
    %v1722 = vpop.f32.mrf.mxu0
    %v1723 = vadd.f32 %v353, %v1722
    %v1724 = vpop.f32.mrf.mxu0
    %v1725 = vadd.f32 %v349, %v1724
    %v1726 = vpop.f32.mrf.mxu0
    %v1727 = vadd.f32 %v353, %v1726
    %1728 = vdwg.mxu0
    %1729 = vmatprep.subr.bf16.mxu0 %v1267
    %1730 = vmatpush1.bf16.msra.mxu0 %v1266
    %1731 = vmatprep.subr.bf16.mxu0 %v1263
    %1732 = vmatpush1.bf16.msra.mxu0 %v1262
    %1733 = vmatprep.subr.bf16.mxu0 %v1259
    %1734 = vmatpush1.bf16.msra.mxu0 %v1258
    %1735 = vmatprep.subr.bf16.mxu0 %v1255
    %1736 = vmatpush1.bf16.msra.mxu0 %v1254
    %1737 = vmatprep.subr.bf16.mxu0 %v1251
    %1738 = vmatpush1.bf16.msra.mxu0 %v1250
    %1739 = vmatprep.subr.bf16.mxu0 %v1247
    %1740 = vmatpush1.bf16.msra.mxu0 %v1246
    %1741 = vmatprep.subr.bf16.mxu0 %v1243
    %1742 = vmatpush1.bf16.msra.mxu0 %v1242
    %1743 = vmatprep.subr.bf16.mxu0 %v1239
    %1744 = vmatpush1.bf16.msra.mxu0 %v1238
    %1745 = vmatprep.subr.bf16.mxu0 %v1299
    %1746 = vmatpush2.bf16.msra.mxu0 %v1298
    %1747 = vmatprep.subr.bf16.mxu0 %v1295
    %1748 = vmatpush2.bf16.msra.mxu0 %v1294
    %1749 = vmatprep.subr.bf16.mxu0 %v1291
    %1750 = vmatpush2.bf16.msra.mxu0 %v1290
    %1751 = vmatprep.subr.bf16.mxu0 %v1287
    %1752 = vmatpush2.bf16.msra.mxu0 %v1286
    %1753 = vmatprep.subr.bf16.mxu0 %v1283
    %1754 = vmatpush2.bf16.msra.mxu0 %v1282
    %1755 = vmatprep.subr.bf16.mxu0 %v1279
    %1756 = vmatpush2.bf16.msra.mxu0 %v1278
    %1757 = vmatprep.subr.bf16.mxu0 %v1275
    %1758 = vmatpush2.bf16.msra.mxu0 %v1274
    %1759 = vmatprep.subr.bf16.mxu0 %v1271
    %1760 = vmatpush2.bf16.msra.mxu0 %v1270
    %1761 = vmatprep.mubr.bf16.mxu0 %v393
    %1762 = vmatmul.mubr.bf16.gmra.mxu0 %v392
    %v1763 = vpop.f32.mrf.mxu0
    %v1764 = vadd.f32 %v1721, %v1763
    %v1765 = vpop.f32.mrf.mxu0
    %v1766 = vadd.f32 %v1723, %v1765
    %v1767 = vpop.f32.mrf.mxu0
    %v1768 = vadd.f32 %v1725, %v1767
    %v1769 = vpop.f32.mrf.mxu0
    %v1770 = vadd.f32 %v1727, %v1769
    %1771 = vdwg.mxu0
    %1772 = vmatprep.subr.bf16.mxu0 %v1331
    %1773 = vmatpush1.bf16.msra.mxu0 %v1330
    %1774 = vmatprep.subr.bf16.mxu0 %v1327
    %1775 = vmatpush1.bf16.msra.mxu0 %v1326
    %1776 = vmatprep.subr.bf16.mxu0 %v1323
    %1777 = vmatpush1.bf16.msra.mxu0 %v1322
    %1778 = vmatprep.subr.bf16.mxu0 %v1319
    %1779 = vmatpush1.bf16.msra.mxu0 %v1318
    %1780 = vmatprep.subr.bf16.mxu0 %v1315
    %1781 = vmatpush1.bf16.msra.mxu0 %v1314
    %1782 = vmatprep.subr.bf16.mxu0 %v1311
    %1783 = vmatpush1.bf16.msra.mxu0 %v1310
    %1784 = vmatprep.subr.bf16.mxu0 %v1307
    %1785 = vmatpush1.bf16.msra.mxu0 %v1306
    %1786 = vmatprep.subr.bf16.mxu0 %v1303
    %1787 = vmatpush1.bf16.msra.mxu0 %v1302
    %1788 = vmatprep.subr.bf16.mxu0 %v1363
    %1789 = vmatpush2.bf16.msra.mxu0 %v1362
    %1790 = vmatprep.subr.bf16.mxu0 %v1359
    %1791 = vmatpush2.bf16.msra.mxu0 %v1358
    %1792 = vmatprep.subr.bf16.mxu0 %v1355
    %1793 = vmatpush2.bf16.msra.mxu0 %v1354
    %1794 = vmatprep.subr.bf16.mxu0 %v1351
    %1795 = vmatpush2.bf16.msra.mxu0 %v1350
    %1796 = vmatprep.subr.bf16.mxu0 %v1347
    %1797 = vmatpush2.bf16.msra.mxu0 %v1346
    %1798 = vmatprep.subr.bf16.mxu0 %v1343
    %1799 = vmatpush2.bf16.msra.mxu0 %v1342
    %1800 = vmatprep.subr.bf16.mxu0 %v1339
    %1801 = vmatpush2.bf16.msra.mxu0 %v1338
    %1802 = vmatprep.subr.bf16.mxu0 %v1335
    %1803 = vmatpush2.bf16.msra.mxu0 %v1334
    %1804 = vmatprep.mubr.bf16.mxu0 %v395
    %1805 = vmatmul.mubr.bf16.gmra.mxu0 %v394
    %v1806 = vpop.f32.mrf.mxu0
    %v1807 = vadd.f32 %v1764, %v1806
    %v1808 = vpop.f32.mrf.mxu0
    %v1809 = vadd.f32 %v1766, %v1808
    %v1810 = vpop.f32.mrf.mxu0
    %v1811 = vadd.f32 %v1768, %v1810
    %v1812 = vpop.f32.mrf.mxu0
    %v1813 = vadd.f32 %v1770, %v1812
    %1814 = vdwg.mxu0
    %1815 = vmatprep.subr.bf16.mxu0 %v1395
    %1816 = vmatpush1.bf16.msra.mxu0 %v1394
    %1817 = vmatprep.subr.bf16.mxu0 %v1391
    %1818 = vmatpush1.bf16.msra.mxu0 %v1390
    %1819 = vmatprep.subr.bf16.mxu0 %v1387
    %1820 = vmatpush1.bf16.msra.mxu0 %v1386
    %1821 = vmatprep.subr.bf16.mxu0 %v1383
    %1822 = vmatpush1.bf16.msra.mxu0 %v1382
    %1823 = vmatprep.subr.bf16.mxu0 %v1379
    %1824 = vmatpush1.bf16.msra.mxu0 %v1378
    %1825 = vmatprep.subr.bf16.mxu0 %v1375
    %1826 = vmatpush1.bf16.msra.mxu0 %v1374
    %1827 = vmatprep.subr.bf16.mxu0 %v1371
    %1828 = vmatpush1.bf16.msra.mxu0 %v1370
    %1829 = vmatprep.subr.bf16.mxu0 %v1367
    %1830 = vmatpush1.bf16.msra.mxu0 %v1366
    %1831 = vmatprep.subr.bf16.mxu0 %v1427
    %1832 = vmatpush2.bf16.msra.mxu0 %v1426
    %1833 = vmatprep.subr.bf16.mxu0 %v1423
    %1834 = vmatpush2.bf16.msra.mxu0 %v1422
    %1835 = vmatprep.subr.bf16.mxu0 %v1419
    %1836 = vmatpush2.bf16.msra.mxu0 %v1418
    %1837 = vmatprep.subr.bf16.mxu0 %v1415
    %1838 = vmatpush2.bf16.msra.mxu0 %v1414
    %1839 = vmatprep.subr.bf16.mxu0 %v1411
    %1840 = vmatpush2.bf16.msra.mxu0 %v1410
    %1841 = vmatprep.subr.bf16.mxu0 %v1407
    %1842 = vmatpush2.bf16.msra.mxu0 %v1406
    %1843 = vmatprep.subr.bf16.mxu0 %v1403
    %1844 = vmatpush2.bf16.msra.mxu0 %v1402
    %1845 = vmatprep.subr.bf16.mxu0 %v1399
    %1846 = vmatpush2.bf16.msra.mxu0 %v1398
    %1847 = vmatprep.mubr.bf16.mxu0 %v397
    %1848 = vmatmul.mubr.bf16.gmra.mxu0 %v396
    %v1849 = vpop.f32.mrf.mxu0
    %v1850 = vadd.f32 %v1807, %v1849
    %v1851 = vpop.f32.mrf.mxu0
    %v1852 = vadd.f32 %v1809, %v1851
    %v1853 = vpop.f32.mrf.mxu0
    %v1854 = vadd.f32 %v1811, %v1853
    %v1855 = vpop.f32.mrf.mxu0
    %v1856 = vadd.f32 %v1813, %v1855
    %1857 = vdwg.mxu0
    %1858 = vmatprep.subr.bf16.mxu0 %v1205
    %1859 = vmatpush1.bf16.msra.mxu0 %v1204
    %1860 = vmatprep.subr.bf16.mxu0 %v1201
    %1861 = vmatpush1.bf16.msra.mxu0 %v1200
    %1862 = vmatprep.subr.bf16.mxu0 %v1197
    %1863 = vmatpush1.bf16.msra.mxu0 %v1196
    %1864 = vmatprep.subr.bf16.mxu0 %v1193
    %1865 = vmatpush1.bf16.msra.mxu0 %v1192
    %1866 = vmatprep.subr.bf16.mxu0 %v1189
    %1867 = vmatpush1.bf16.msra.mxu0 %v1188
    %1868 = vmatprep.subr.bf16.mxu0 %v1185
    %1869 = vmatpush1.bf16.msra.mxu0 %v1184
    %1870 = vmatprep.subr.bf16.mxu0 %v1181
    %1871 = vmatpush1.bf16.msra.mxu0 %v1180
    %1872 = vmatprep.subr.bf16.mxu0 %v1177
    %1873 = vmatpush1.bf16.msra.mxu0 %v1176
    %1874 = vmatprep.subr.bf16.mxu0 %v1237
    %1875 = vmatpush2.bf16.msra.mxu0 %v1236
    %1876 = vmatprep.subr.bf16.mxu0 %v1233
    %1877 = vmatpush2.bf16.msra.mxu0 %v1232
    %1878 = vmatprep.subr.bf16.mxu0 %v1229
    %1879 = vmatpush2.bf16.msra.mxu0 %v1228
    %1880 = vmatprep.subr.bf16.mxu0 %v1225
    %1881 = vmatpush2.bf16.msra.mxu0 %v1224
    %1882 = vmatprep.subr.bf16.mxu0 %v1221
    %1883 = vmatpush2.bf16.msra.mxu0 %v1220
    %1884 = vmatprep.subr.bf16.mxu0 %v1217
    %1885 = vmatpush2.bf16.msra.mxu0 %v1216
    %1886 = vmatprep.subr.bf16.mxu0 %v1213
    %1887 = vmatpush2.bf16.msra.mxu0 %v1212
    %1888 = vmatprep.subr.bf16.mxu0 %v1209
    %1889 = vmatpush2.bf16.msra.mxu0 %v1208
    %1890 = vmatprep.mubr.bf16.mxu0 %v391
    %1891 = vmatmul.mubr.bf16.gmra.mxu0 %v390
    %v1892 = vpop.f32.mrf.mxu0
    %v1893 = vadd.f32 %v357, %v1892
    %v1894 = vpop.f32.mrf.mxu0
    %v1895 = vadd.f32 %v361, %v1894
    %v1896 = vpop.f32.mrf.mxu0
    %v1897 = vadd.f32 %v357, %v1896
    %v1898 = vpop.f32.mrf.mxu0
    %v1899 = vadd.f32 %v361, %v1898
    %1900 = vdwg.mxu0
    %1901 = vmatprep.subr.bf16.mxu0 %v1269
    %1902 = vmatpush1.bf16.msra.mxu0 %v1268
    %1903 = vmatprep.subr.bf16.mxu0 %v1265
    %1904 = vmatpush1.bf16.msra.mxu0 %v1264
    %1905 = vmatprep.subr.bf16.mxu0 %v1261
    %1906 = vmatpush1.bf16.msra.mxu0 %v1260
    %1907 = vmatprep.subr.bf16.mxu0 %v1257
    %1908 = vmatpush1.bf16.msra.mxu0 %v1256
    %1909 = vmatprep.subr.bf16.mxu0 %v1253
    %1910 = vmatpush1.bf16.msra.mxu0 %v1252
    %1911 = vmatprep.subr.bf16.mxu0 %v1249
    %1912 = vmatpush1.bf16.msra.mxu0 %v1248
    %1913 = vmatprep.subr.bf16.mxu0 %v1245
    %1914 = vmatpush1.bf16.msra.mxu0 %v1244
    %1915 = vmatprep.subr.bf16.mxu0 %v1241
    %1916 = vmatpush1.bf16.msra.mxu0 %v1240
    %1917 = vmatprep.subr.bf16.mxu0 %v1301
    %1918 = vmatpush2.bf16.msra.mxu0 %v1300
    %1919 = vmatprep.subr.bf16.mxu0 %v1297
    %1920 = vmatpush2.bf16.msra.mxu0 %v1296
    %1921 = vmatprep.subr.bf16.mxu0 %v1293
    %1922 = vmatpush2.bf16.msra.mxu0 %v1292
    %1923 = vmatprep.subr.bf16.mxu0 %v1289
    %1924 = vmatpush2.bf16.msra.mxu0 %v1288
    %1925 = vmatprep.subr.bf16.mxu0 %v1285
    %1926 = vmatpush2.bf16.msra.mxu0 %v1284
    %1927 = vmatprep.subr.bf16.mxu0 %v1281
    %1928 = vmatpush2.bf16.msra.mxu0 %v1280
    %1929 = vmatprep.subr.bf16.mxu0 %v1277
    %1930 = vmatpush2.bf16.msra.mxu0 %v1276
    %1931 = vmatprep.subr.bf16.mxu0 %v1273
    %1932 = vmatpush2.bf16.msra.mxu0 %v1272
    %1933 = vmatprep.mubr.bf16.mxu0 %v393
    %1934 = vmatmul.mubr.bf16.gmra.mxu0 %v392
    %v1935 = vpop.f32.mrf.mxu0
    %v1936 = vadd.f32 %v1893, %v1935
    %v1937 = vpop.f32.mrf.mxu0
    %v1938 = vadd.f32 %v1895, %v1937
    %v1939 = vpop.f32.mrf.mxu0
    %v1940 = vadd.f32 %v1897, %v1939
    %v1941 = vpop.f32.mrf.mxu0
    %v1942 = vadd.f32 %v1899, %v1941
    %1943 = vdwg.mxu0
    %1944 = vmatprep.subr.bf16.mxu0 %v1333
    %1945 = vmatpush1.bf16.msra.mxu0 %v1332
    %1946 = vmatprep.subr.bf16.mxu0 %v1329
    %1947 = vmatpush1.bf16.msra.mxu0 %v1328
    %1948 = vmatprep.subr.bf16.mxu0 %v1325
    %1949 = vmatpush1.bf16.msra.mxu0 %v1324
    %1950 = vmatprep.subr.bf16.mxu0 %v1321
    %1951 = vmatpush1.bf16.msra.mxu0 %v1320
    %1952 = vmatprep.subr.bf16.mxu0 %v1317
    %1953 = vmatpush1.bf16.msra.mxu0 %v1316
    %1954 = vmatprep.subr.bf16.mxu0 %v1313
    %1955 = vmatpush1.bf16.msra.mxu0 %v1312
    %1956 = vmatprep.subr.bf16.mxu0 %v1309
    %1957 = vmatpush1.bf16.msra.mxu0 %v1308
    %1958 = vmatprep.subr.bf16.mxu0 %v1305
    %1959 = vmatpush1.bf16.msra.mxu0 %v1304
    %1960 = vmatprep.subr.bf16.mxu0 %v1365
    %1961 = vmatpush2.bf16.msra.mxu0 %v1364
    %1962 = vmatprep.subr.bf16.mxu0 %v1361
    %1963 = vmatpush2.bf16.msra.mxu0 %v1360
    %1964 = vmatprep.subr.bf16.mxu0 %v1357
    %1965 = vmatpush2.bf16.msra.mxu0 %v1356
    %1966 = vmatprep.subr.bf16.mxu0 %v1353
    %1967 = vmatpush2.bf16.msra.mxu0 %v1352
    %1968 = vmatprep.subr.bf16.mxu0 %v1349
    %1969 = vmatpush2.bf16.msra.mxu0 %v1348
    %1970 = vmatprep.subr.bf16.mxu0 %v1345
    %1971 = vmatpush2.bf16.msra.mxu0 %v1344
    %1972 = vmatprep.subr.bf16.mxu0 %v1341
    %1973 = vmatpush2.bf16.msra.mxu0 %v1340
    %1974 = vmatprep.subr.bf16.mxu0 %v1337
    %1975 = vmatpush2.bf16.msra.mxu0 %v1336
    %1976 = vmatprep.mubr.bf16.mxu0 %v395
    %1977 = vmatmul.mubr.bf16.gmra.mxu0 %v394
    %v1978 = vpop.f32.mrf.mxu0
    %v1979 = vadd.f32 %v1936, %v1978
    %v1980 = vpop.f32.mrf.mxu0
    %v1981 = vadd.f32 %v1938, %v1980
    %v1982 = vpop.f32.mrf.mxu0
    %v1983 = vadd.f32 %v1940, %v1982
    %v1984 = vpop.f32.mrf.mxu0
    %v1985 = vadd.f32 %v1942, %v1984
    %1986 = vdwg.mxu0
    %1987 = vmatprep.subr.bf16.mxu0 %v1397
    %1988 = vmatpush1.bf16.msra.mxu0 %v1396
    %1989 = vmatprep.subr.bf16.mxu0 %v1393
    %1990 = vmatpush1.bf16.msra.mxu0 %v1392
    %1991 = vmatprep.subr.bf16.mxu0 %v1389
    %1992 = vmatpush1.bf16.msra.mxu0 %v1388
    %1993 = vmatprep.subr.bf16.mxu0 %v1385
    %1994 = vmatpush1.bf16.msra.mxu0 %v1384
    %1995 = vmatprep.subr.bf16.mxu0 %v1381
    %1996 = vmatpush1.bf16.msra.mxu0 %v1380
    %1997 = vmatprep.subr.bf16.mxu0 %v1377
    %1998 = vmatpush1.bf16.msra.mxu0 %v1376
    %1999 = vmatprep.subr.bf16.mxu0 %v1373
    %2000 = vmatpush1.bf16.msra.mxu0 %v1372
    %2001 = vmatprep.subr.bf16.mxu0 %v1369
    %2002 = vmatpush1.bf16.msra.mxu0 %v1368
    %2003 = vmatprep.subr.bf16.mxu0 %v1429
    %2004 = vmatpush2.bf16.msra.mxu0 %v1428
    %2005 = vmatprep.subr.bf16.mxu0 %v1425
    %2006 = vmatpush2.bf16.msra.mxu0 %v1424
    %2007 = vmatprep.subr.bf16.mxu0 %v1421
    %2008 = vmatpush2.bf16.msra.mxu0 %v1420
    %2009 = vmatprep.subr.bf16.mxu0 %v1417
    %2010 = vmatpush2.bf16.msra.mxu0 %v1416
    %2011 = vmatprep.subr.bf16.mxu0 %v1413
    %2012 = vmatpush2.bf16.msra.mxu0 %v1412
    %2013 = vmatprep.subr.bf16.mxu0 %v1409
    %2014 = vmatpush2.bf16.msra.mxu0 %v1408
    %2015 = vmatprep.subr.bf16.mxu0 %v1405
    %2016 = vmatpush2.bf16.msra.mxu0 %v1404
    %2017 = vmatprep.subr.bf16.mxu0 %v1401
    %2018 = vmatpush2.bf16.msra.mxu0 %v1400
    %2019 = vmatprep.mubr.bf16.mxu0 %v397
    %2020 = vmatmul.mubr.bf16.gmra.mxu0 %v396
    %v2021 = vpop.f32.mrf.mxu0
    %v2022 = vadd.f32 %v1979, %v2021
    %v2023 = vpop.f32.mrf.mxu0
    %v2024 = vadd.f32 %v1981, %v2023
    %v2025 = vpop.f32.mrf.mxu0
    %v2026 = vadd.f32 %v1983, %v2025
    %v2027 = vpop.f32.mrf.mxu0
    %v2028 = vadd.f32 %v1985, %v2027
    %2029 = vdwg.mxu0
    %v2030 = vtanh.pop %v1850
    %v2031 = vtanh.pop %v1852
    %v2032 = vtanh.pop %v2022
    %v2033 = vtanh.pop %v2024
    %v2034 = vtanh.pop %v1854
    %v2035 = vtanh.pop %v1856
    %v2036 = vtanh.pop %v2026
    %v2037 = vtanh.pop %v2028
    %v2038 = vpack.c.bf16 %v2034, %v2030
    %v2039 = vpack.c.bf16 %v2035, %v2031
    %v2040 = vpack.c.bf16 %v2036, %v2032
    %v2041 = vpack.c.bf16 %v2037, %v2033
    %v2046 = vunpack.c.l.b16 %v2038
    %v2047 = vunpack.c.l.b16 %v2039
    %v2048 = vunpack.c.l.b16 %v2040
    %v2049 = vunpack.c.l.b16 %v2041
    %v2050 = vunpack.c.h.b16 %v2038
    %v2051 = vunpack.c.h.b16 %v2039
    %v2052 = vunpack.c.h.b16 %v2040
    %v2053 = vunpack.c.h.b16 %v2041
    %v2054 = vpack.c.b16 %v2047, %v2046
    %v2055 = vpack.c.b16 %v2049, %v2048
    %v2056 = vpack.c.b16 %v2051, %v2050
    %v2057 = vpack.c.b16 %v2053, %v2052
    %s2062 = sld [smem:[#allocation2]]
    %v2063 = vld [vmem:[#allocation10] sm:$0xf]
    %v2066 = vunpack.c.l.s4 1966171168
    %v2067 = vunpack.c.0.s8 %v2066
    %v2068 = vlaneseq
    %v2069 = vshrl.u32 %v2068, 7
    %v2070 = vsub.s32 %v2067, %v2069
    %v2071 = vrot.slane %v2063, %v2070
    %v2072 = vcombine.high %v2071, %v2071
    %v2074 = vunpack.c.l.s4 1966171168
    %v2075 = vunpack.c.0.s8 %v2074
    %v2076 = vlaneseq
    %v2077 = vshrl.u32 %v2076, 7
    %v2078 = vsub.s32 %v2075, %v2077
    %v2079 = vrot.slane %v2071, %v2078
    %v2081 = vunpack.c.l.s4 1966171168
    %v2082 = vunpack.c.0.s8 %v2081
    %v2083 = vlaneseq
    %v2084 = vshrl.u32 %v2083, 7
    %v2085 = vsub.s32 %v2082, %v2084
    %v2086 = vrot.slane %v2072, %v2085
    %v2087 = vcombine.high %v2079, %v2079
    %v2088 = vcombine.high %v2086, %v2086
    %v2090 = vpack.i.b16 %v2079, %v2079
    %v2092 = vlaneseq
    %v2093 = vshrl.u32 %v2092, 7
    %v2094 = vsub.s32 0, %v2093
    %v2095 = vrot.slane %v2090, %v2094
    %v2097 = vpack.i.b16 %v2086, %v2086
    %v2099 = vlaneseq
    %v2100 = vshrl.u32 %v2099, 7
    %v2101 = vsub.s32 0, %v2100
    %v2102 = vrot.slane %v2097, %v2101
    %v2104 = vpack.i.b16 %v2087, %v2087
    %v2106 = vlaneseq
    %v2107 = vshrl.u32 %v2106, 7
    %v2108 = vsub.s32 0, %v2107
    %v2109 = vrot.slane %v2104, %v2108
    %v2111 = vpack.i.b16 %v2088, %v2088
    %v2113 = vlaneseq
    %v2114 = vshrl.u32 %v2113, 7
    %v2115 = vsub.s32 0, %v2114
    %v2116 = vrot.slane %v2111, %v2115
    %v2121 = vunpack.c.l.b16 %v2095
    %v2122 = vunpack.c.l.b16 %v2102
    %v2123 = vunpack.c.l.b16 %v2109
    %v2124 = vunpack.c.l.b16 %v2116
    %v2125 = vpack.c.b16 %v2122, %v2121
    %v2126 = vpack.c.b16 %v2124, %v2123
    %v2129 = vmul.bf16 %v2054, %v2125
    %v2130 = vmul.bf16 %v2055, %v2126
    %v2131 = vmul.bf16 %v2056, %v2125
    %v2132 = vmul.bf16 %v2057, %v2126
    %v2133 = vunpack.c.l.bf16 %v2129
    %v2134 = vunpack.c.h.bf16 %v2129
    %v2135 = vunpack.c.l.bf16 %v2130
    %v2136 = vunpack.c.h.bf16 %v2130
    %v2137 = vunpack.c.l.bf16 %v2131
    %v2138 = vunpack.c.h.bf16 %v2131
    %v2139 = vunpack.c.l.bf16 %v2132
    %v2140 = vunpack.c.h.bf16 %v2132
    %v2141 = vadd.f32 %v2133, %v2134
    %v2142 = vadd.f32 %v2141, %v2135
    %v2143 = vadd.f32 %v2142, %v2136
    %2144 = vadd.xlane.f32.xlu0 %v2143
    %v2145 = vpop.xlane.xlu0 %2144
    %v2146 = vadd.f32 %v2137, %v2138
    %v2147 = vadd.f32 %v2146, %v2139
    %v2148 = vadd.f32 %v2147, %v2140
    %2149 = vadd.xlane.f32.xlu0 %v2148
    %v2150 = vpop.xlane.xlu0 %2149
    %v2151 = vstv %s2062
    %v2152 = vadd.f32 %v2145, %v2151
    %v2153 = vadd.f32 %v2150, %v2151
    %v2154 = vld [vmem:[%s4] sm:$0xff]
    %v2156 = vcombine.high %v2154, %v2154
    %v2158 = vunpack.c.l.s4 1966171168
    %v2159 = vunpack.c.0.s8 %v2158
    %v2160 = vlaneseq
    %v2161 = vshrl.u32 %v2160, 7
    %v2162 = vsub.s32 %v2159, %v2161
    %v2163 = vrot.slane %v2154, %v2162
    %v2165 = vunpack.c.l.s4 1966171168
    %v2166 = vunpack.c.0.s8 %v2165
    %v2167 = vlaneseq
    %v2168 = vshrl.u32 %v2167, 7
    %v2169 = vsub.s32 %v2166, %v2168
    %v2170 = vrot.slane %v2156, %v2169
    %v2171 = vcombine.high %v2163, %v2163
    %v2172 = vcombine.high %v2170, %v2170
    %v2174 = vunpack.c.l.s4 1966171168
    %v2175 = vunpack.c.0.s8 %v2174
    %v2176 = vlaneseq
    %v2177 = vshrl.u32 %v2176, 7
    %v2178 = vsub.s32 %v2175, %v2177
    %v2179 = vrot.slane %v2163, %v2178
    %v2181 = vunpack.c.l.s4 1966171168
    %v2182 = vunpack.c.0.s8 %v2181
    %v2183 = vlaneseq
    %v2184 = vshrl.u32 %v2183, 7
    %v2185 = vsub.s32 %v2182, %v2184
    %v2186 = vrot.slane %v2170, %v2185
    %v2188 = vunpack.c.l.s4 1966171168
    %v2189 = vunpack.c.0.s8 %v2188
    %v2190 = vlaneseq
    %v2191 = vshrl.u32 %v2190, 7
    %v2192 = vsub.s32 %v2189, %v2191
    %v2193 = vrot.slane %v2171, %v2192
    %v2195 = vunpack.c.l.s4 1966171168
    %v2196 = vunpack.c.0.s8 %v2195
    %v2197 = vlaneseq
    %v2198 = vshrl.u32 %v2197, 7
    %v2199 = vsub.s32 %v2196, %v2198
    %v2200 = vrot.slane %v2172, %v2199
    %v2201 = vcombine.high %v2179, %v2179
    %v2202 = vcombine.high %v2186, %v2186
    %v2203 = vcombine.high %v2193, %v2193
    %v2204 = vcombine.high %v2200, %v2200
    %v2206 = vpack.i.b16 %v2179, %v2179
    %v2208 = vlaneseq
    %v2209 = vshrl.u32 %v2208, 7
    %v2210 = vsub.s32 0, %v2209
    %v2211 = vrot.slane %v2206, %v2210
    %v2213 = vpack.i.b16 %v2193, %v2193
    %v2215 = vlaneseq
    %v2216 = vshrl.u32 %v2215, 7
    %v2217 = vsub.s32 0, %v2216
    %v2218 = vrot.slane %v2213, %v2217
    %v2220 = vpack.i.b16 %v2201, %v2201
    %v2222 = vlaneseq
    %v2223 = vshrl.u32 %v2222, 7
    %v2224 = vsub.s32 0, %v2223
    %v2225 = vrot.slane %v2220, %v2224
    %v2227 = vpack.i.b16 %v2203, %v2203
    %v2229 = vlaneseq
    %v2230 = vshrl.u32 %v2229, 7
    %v2231 = vsub.s32 0, %v2230
    %v2232 = vrot.slane %v2227, %v2231
    %v2234 = vpack.i.b16 %v2186, %v2186
    %v2236 = vlaneseq
    %v2237 = vshrl.u32 %v2236, 7
    %v2238 = vsub.s32 0, %v2237
    %v2239 = vrot.slane %v2234, %v2238
    %v2241 = vpack.i.b16 %v2200, %v2200
    %v2243 = vlaneseq
    %v2244 = vshrl.u32 %v2243, 7
    %v2245 = vsub.s32 0, %v2244
    %v2246 = vrot.slane %v2241, %v2245
    %v2248 = vpack.i.b16 %v2202, %v2202
    %v2250 = vlaneseq
    %v2251 = vshrl.u32 %v2250, 7
    %v2252 = vsub.s32 0, %v2251
    %v2253 = vrot.slane %v2248, %v2252
    %v2255 = vpack.i.b16 %v2204, %v2204
    %v2257 = vlaneseq
    %v2258 = vshrl.u32 %v2257, 7
    %v2259 = vsub.s32 0, %v2258
    %v2260 = vrot.slane %v2255, %v2259
    %v2269 = vunpack.c.l.b16 %v2211
    %v2270 = vunpack.c.l.b16 %v2218
    %v2271 = vunpack.c.l.b16 %v2225
    %v2272 = vunpack.c.l.b16 %v2232
    %v2273 = vunpack.c.l.b16 %v2239
    %v2274 = vunpack.c.l.b16 %v2246
    %v2275 = vunpack.c.l.b16 %v2253
    %v2276 = vunpack.c.l.b16 %v2260
    %v2277 = vpack.c.b16 %v2270, %v2269
    %v2278 = vpack.c.b16 %v2272, %v2271
    %v2279 = vpack.c.b16 %v2274, %v2273
    %v2280 = vpack.c.b16 %v2276, %v2275
    %v2285 = vmul.bf16 %v80, %v2277
    %v2286 = vmul.bf16 %v81, %v2278
    %v2287 = vmul.bf16 %v82, %v2279
    %v2288 = vmul.bf16 %v83, %v2280
    %v2289 = vmul.bf16 %v84, %v2277
    %v2290 = vmul.bf16 %v85, %v2278
    %v2291 = vmul.bf16 %v86, %v2279
    %v2292 = vmul.bf16 %v87, %v2280
    %v2293 = vunpack.c.l.bf16 %v2285
    %v2294 = vunpack.c.h.bf16 %v2285
    %v2295 = vunpack.c.l.bf16 %v2286
    %v2296 = vunpack.c.h.bf16 %v2286
    %v2297 = vunpack.c.l.bf16 %v2287
    %v2298 = vunpack.c.h.bf16 %v2287
    %v2299 = vunpack.c.l.bf16 %v2288
    %v2300 = vunpack.c.h.bf16 %v2288
    %v2301 = vunpack.c.l.bf16 %v2289
    %v2302 = vunpack.c.h.bf16 %v2289
    %v2303 = vunpack.c.l.bf16 %v2290
    %v2304 = vunpack.c.h.bf16 %v2290
    %v2305 = vunpack.c.l.bf16 %v2291
    %v2306 = vunpack.c.h.bf16 %v2291
    %v2307 = vunpack.c.l.bf16 %v2292
    %v2308 = vunpack.c.h.bf16 %v2292
    %v2309 = vadd.f32 %v2293, %v2294
    %v2310 = vadd.f32 %v2309, %v2295
    %v2311 = vadd.f32 %v2310, %v2296
    %v2312 = vadd.f32 %v2311, %v2297
    %v2313 = vadd.f32 %v2312, %v2298
    %v2314 = vadd.f32 %v2313, %v2299
    %v2315 = vadd.f32 %v2314, %v2300
    %2316 = vadd.xlane.f32.xlu0 %v2315
    %v2317 = vpop.xlane.xlu0 %2316
    %v2318 = vadd.f32 %v2301, %v2302
    %v2319 = vadd.f32 %v2318, %v2303
    %v2320 = vadd.f32 %v2319, %v2304
    %v2321 = vadd.f32 %v2320, %v2305
    %v2322 = vadd.f32 %v2321, %v2306
    %v2323 = vadd.f32 %v2322, %v2307
    %v2324 = vadd.f32 %v2323, %v2308
    %2325 = vadd.xlane.f32.xlu0 %v2324
    %v2326 = vpop.xlane.xlu0 %2325
    %v2329 = vlaneseq
    %v2330 = vand.u32 %v2329, 127
    %v2331 = vlaneseq
    %v2332 = vshrl.u32 %v2331, 7
    %v2333 = vsub.s32 %v2330, %v2332
    %v2334 = vrot.slane %v2152, %v2333
    %v2335 = vlaneseq
    %v2336 = vshrl.u32 %v2335, 7
    %v2337 = vsub.s32 %v2330, %v2336
    %v2338 = vrot.slane %v2153, %v2337
    %vm2339 = vcmask 1041409
    %v2340 = vsel %vm2339, %v2338, %v2334
    %vm2342 = vcmask 58368
    %v2343 = vsel %vm2342, %v2340, -inf
    %2344 = vmax.xlane.f32.xlu0 %v2343
    %v2345 = vpop.xlane.xlu0 %2344
    %v2347 = vlaneseq
    %v2348 = vshrl.u32 %v2347, 7
    %v2349 = vsub.s32 0, %v2348
    %v2350 = vrot.slane %v2345, %v2349
    %v2351 = vlaneseq
    %v2352 = vshrl.u32 %v2351, 7
    %v2353 = vsub.s32 1, %v2352
    %v2354 = vrot.slane %v2345, %v2353
    %v2357 = vsub.f32 %v2152, %v2350
    %v2358 = vsub.f32 %v2153, %v2354
    %v2359 = vmul.f32 %v2357, 1.442695
    %v2360 = vpow.pop %v2359
    %v2361 = vmul.f32 %v2358, 1.442695
    %v2362 = vpow.pop %v2361
    %v2363 = vmul.f32 %v2360, %v2317
    %v2364 = vmul.f32 %v2362, %v2326
    %2367 = vset.pattern.permute.xlu0 0
    %2368 = vperm.xlu0 %2367, %v2363
    %v2369 = vpop.permute.xlu0 %2368
    %2370 = vset.pattern.permute.xlu0 0
    %2371 = vperm.xlu0 %2370, %v2364
    %v2372 = vpop.permute.xlu0 %2371
    %v2373 = vlaneseq
    %v2374 = vshrl.u32 %v2373, 7
    %v2375 = vsub.s32 %v2330, %v2374
    %v2376 = vrot.slane %v2369, %v2375
    %v2377 = vlaneseq
    %v2378 = vshrl.u32 %v2377, 7
    %v2379 = vsub.s32 %v2330, %v2378
    %v2380 = vrot.slane %v2372, %v2379
    %v2381 = vsel %vm2339, %v2380, %v2376
    %v2383 = vsel %vm2342, %v2381, 0.0
    %2384 = vadd.xlane.f32.xlu0 %v2383
    %v2385 = vpop.xlane.xlu0 %2384
    %2388 = vset.pattern.permute.xlu0 0
    %2389 = vperm.xlu0 %2388, %v2360
    %v2390 = vpop.permute.xlu0 %2389
    %2391 = vset.pattern.permute.xlu0 0
    %2392 = vperm.xlu0 %2391, %v2362
    %v2393 = vpop.permute.xlu0 %2392
    %v2394 = vlaneseq
    %v2395 = vshrl.u32 %v2394, 7
    %v2396 = vsub.s32 %v2330, %v2395
    %v2397 = vrot.slane %v2390, %v2396
    %v2398 = vlaneseq
    %v2399 = vshrl.u32 %v2398, 7
    %v2400 = vsub.s32 %v2330, %v2399
    %v2401 = vrot.slane %v2393, %v2400
    %v2402 = vsel %vm2339, %v2401, %v2397
    %v2404 = vsel %vm2342, %v2402, 0.0
    %2405 = vadd.xlane.f32.xlu0 %v2404
    %v2406 = vpop.xlane.xlu0 %2405
    %s2407 = sld [smem:[#allocation3]]
    %v2408 = vrcp.pop %v2406
    %v2409 = vmul.f32 %v2385, %v2408
    %v2410 = vstv %s2407
    %v2411 = vadd.f32 %v2409, %v2410
    %2412 = vst [vmem:[#allocation12] sm:$0x3] %v2411
    // Predicated region
    $region46: #{tpu_custom_call.1} parent=1 // pred_check
      _
    $region47: #{tpu_custom_call.1} parent=1 // pred_check_branch
      %2414 = sbr.rel (0) target = $region49
    $region48: #{tpu_custom_call.1} parent=1 // pred_region
      %s2416 = ssub.s32 32, 32
      %2417 = vsyncadd [#allocation6], %s2416
      %s2419 = sshll.u32 [#allocation12], 4
      %s2420 = int_to_ptr.vmem [resolvable:$true] %s2419
      %2422 = dma.vmem_to_hbm [thread:$0]  %s2420, 32, %s7, [#allocation6]
    $region49: #{tpu_custom_call.1} parent=1 // pred_fallthru
      _
    // Predicated region
    $region50: #{tpu_custom_call.1} parent=1 // pred_check
      _
    $region51: #{tpu_custom_call.1} parent=1 // pred_check_branch
      %2424 = sbr.rel (0) target = $region53
    $region52: #{tpu_custom_call.1} parent=1 // pred_region
      %2425 = dma.done [#allocation6], 32
    $region53: #{tpu_custom_call.1} parent=1 // pred_fallthru
      _
    %2426 = vsyncpa [#allocation5], 1
    %2427 = vsyncpa [#allocation8], 1
    %2428 = vsyncpa [#allocation11], 1
    %2429 = vsyncpa [#allocation6], 1

</llo_original>
